<compile_context>
chip_gen: v7x
topology: tpu7x:2x2x1
jax: 0.10.0
libtpu: 0.0.40
codegen_flags: <defaults>
</compile_context>

<pallas_src>
import jax
import jax.numpy as jnp
from jax.experimental import pallas as pl
from jax.experimental.pallas import tpu as pltpu

K = 7      # conv kernel size
PAD = 3    # conv padding


def spatial_attention_kernel(x_ref, w_ref, o_ref, pads_ref):
    # x_ref   : (1, C, H, W)  VMEM    raw input block (no HBM padding)
    # w_ref   : (98,)         SMEM    conv weight, flattened [c*49 + kh*7 + kw]
    # o_ref   : (1, 1, H, W)  VMEM    sigmoid(conv(cat(mean_c, max_c)))
    # pads_ref: (2, Hp, Wp)   VMEM scratch: zero-padded avg / max planes
    C = x_ref.shape[1]
    H = o_ref.shape[2]
    W = o_ref.shape[3]

    # ---- fused single-pass channel mean + max (reads x once) ----
    x0 = x_ref[0, 0].astype(jnp.float32)
    if C <= 32:                      # C is static -> fully unrolled
        s, m = x0, x0
        for c in range(1, C):
            xc = x_ref[0, c].astype(jnp.float32)
            s = s + xc
            m = jnp.maximum(m, xc)
    else:                            # large C: rolled single pass
        def body(c, carry):
            s_, m_ = carry
            xc = x_ref[0, c].astype(jnp.float32)
            return s_ + xc, jnp.maximum(m_, xc)
        s, m = jax.lax.fori_loop(1, C, body, (x0, x0))
    avg = s * (1.0 / C)

    # ---- build zero-padded planes in VMEM scratch (halo only, no HBM pad) ----
    pads_ref[...] = jnp.zeros_like(pads_ref)
    zc = jnp.zeros((H, PAD), jnp.float32)
    pads_ref[0, PAD:PAD + H, :] = jnp.concatenate([zc, avg, zc], axis=1)
    pads_ref[1, PAD:PAD + H, :] = jnp.concatenate([zc, m, zc], axis=1)

    # ---- 7x7 conv: SMEM scalar weights, 14 independent accumulation chains ----
    partials = []
    for c in range(2):               # channel order matches torch.cat([avg, max])
        for kh in range(K):
            rows = pads_ref[c, kh:kh + H, :]           # (H, Wp) masked vector load
            base = (c * K + kh) * K
            part = rows[:, 0:W] * w_ref[base]
            for kw in range(1, K):
                part = part + rows[:, kw:kw + W] * w_ref[base + kw]
            partials.append(part)
    while len(partials) > 1:                           # balanced tree sum
        nxt = [partials[i] + partials[i + 1]
               for i in range(0, len(partials) - 1, 2)]
        if len(partials) % 2:
            nxt.append(partials[-1])
        partials = nxt

    o_ref[0, 0] = jax.nn.sigmoid(partials[0]).astype(o_ref.dtype)


def spatial_attention(x, weight):
    """x: (N, C, H, W) float32, weight: (1, 2, 7, 7) float32 -> (N, 1, H, W)."""
    N, C, H, W = x.shape
    Hp, Wp = H + 2 * PAD, W + 2 * PAD
    w_flat = weight.reshape(2 * K * K).astype(jnp.float32)

    # For very large C*H*W blocks, add a C grid axis ("arbitrary") carrying
    # running sum/max in scratch and set vmem_limit_bytes; unnecessary here.
    return pl.pallas_call(
        spatial_attention_kernel,
        out_shape=jax.ShapeDtypeStruct((N, 1, H, W), x.dtype),
        grid_spec=pltpu.PrefetchScalarGridSpec(
            num_scalar_prefetch=0,
            grid=(N,),
            in_specs=[
                pl.BlockSpec((1, C, H, W), lambda n: (n, 0, 0, 0)),
                pl.BlockSpec(memory_space=pltpu.MemorySpace.SMEM),
            ],
            out_specs=pl.BlockSpec((1, 1, H, W), lambda n: (n, 0, 0, 0)),
            scratch_shapes=[pltpu.VMEM((2, Hp, Wp), jnp.float32)],
        ),
        compiler_params=pltpu.CompilerParams(
            dimension_semantics=("parallel",)),
    )(x, w_flat)


def _reference(x, weight):
    # Pure-JAX reference for correctness check.
    avg = jnp.mean(x, axis=1, keepdims=True)
    mx = jnp.max(x, axis=1, keepdims=True)
    cat = jnp.concatenate([avg, mx], axis=1)
    y = jax.lax.conv_general_dilated(
        cat, weight, window_strides=(1, 1), padding=((PAD, PAD), (PAD, PAD)),
        dimension_numbers=("NCHW", "OIHW", "NCHW"))
    return jax.nn.sigmoid(y)


if __name__ == "__main__":
    key = jax.random.PRNGKey(0)
    kx, kw = jax.random.split(key)

    N, C, H, W = 2, 4, 16, 16
    x = jax.random.normal(kx, (N, C, H, W), dtype=jnp.float32)

    # Deterministic conv weight (PyTorch Conv2d default: uniform(-b, b), b=1/sqrt(fan_in)).
    fan_in = 2 * K * K
    bound = 1.0 / (fan_in ** 0.5)
    weight = jax.random.uniform(kw, (1, 2, K, K), dtype=jnp.float32,
                                minval=-bound, maxval=bound)

    out = spatial_attention(x, weight)
    out = jax.block_until_ready(out)

    ref = _reference(x, weight)
    assert out.shape == (N, 1, H, W)
    assert jnp.allclose(out, ref, atol=1e-5, rtol=1e-5), "mismatch vs reference"

    print("KERNEL_OK")
</pallas_src>

<mosaic_0001>
module attributes {stable_mosaic.version = 11 : i64} {
  func.func @spatial_attention_kernel(%arg0: i32, %arg1: memref<1x4x16x16xf32, #tpu.memory_space<vmem>>, %arg2: memref<98xf32, #tpu.memory_space<smem>>, %arg3: memref<1x1x16x16xf32, #tpu.memory_space<vmem>>, %arg4: memref<2x22x22xf32, #tpu.memory_space<vmem>>) attributes {dimension_semantics = [#tpu.dimension_semantics<parallel>], iteration_bounds = array<i64: 2>, scalar_prefetch = 0 : i64, scratch_operands = 1 : i64, tpu.core_type = #tpu.core_type<tc>, window_params = [{transform_indices = @transform_0, window_bounds = array<i64: 1, 4, 16, 16>}, {transform_indices = @transform_1, window_bounds = array<i64: 98>}, {transform_indices = @transform_2, window_bounds = array<i64: 1, 1, 16, 16>}]} {
    %c0 = arith.constant 0 : index
    %c0_0 = arith.constant 0 : index
    %c0_1 = arith.constant 0 : index
    %c0_2 = arith.constant 0 : index
    %0 = vector.load %arg1[%c0, %c0_0, %c0_1, %c0_2] : memref<1x4x16x16xf32, #tpu.memory_space<vmem>>, vector<1x1x16x16xf32>
    %1 = vector.shape_cast %0 : vector<1x1x16x16xf32> to vector<16x16xf32>
    %c0_3 = arith.constant 0 : index
    %c1 = arith.constant 1 : index
    %c0_4 = arith.constant 0 : index
    %c0_5 = arith.constant 0 : index
    %2 = vector.load %arg1[%c0_3, %c1, %c0_4, %c0_5] : memref<1x4x16x16xf32, #tpu.memory_space<vmem>>, vector<1x1x16x16xf32>
    %3 = vector.shape_cast %2 : vector<1x1x16x16xf32> to vector<16x16xf32>
    %4 = arith.addf %1, %3 : vector<16x16xf32>
    %5 = arith.maximumf %1, %3 : vector<16x16xf32>
    %c0_6 = arith.constant 0 : index
    %c2 = arith.constant 2 : index
    %c0_7 = arith.constant 0 : index
    %c0_8 = arith.constant 0 : index
    %6 = vector.load %arg1[%c0_6, %c2, %c0_7, %c0_8] : memref<1x4x16x16xf32, #tpu.memory_space<vmem>>, vector<1x1x16x16xf32>
    %7 = vector.shape_cast %6 : vector<1x1x16x16xf32> to vector<16x16xf32>
    %8 = arith.addf %4, %7 : vector<16x16xf32>
    %9 = arith.maximumf %5, %7 : vector<16x16xf32>
    %c0_9 = arith.constant 0 : index
    %c3 = arith.constant 3 : index
    %c0_10 = arith.constant 0 : index
    %c0_11 = arith.constant 0 : index
    %10 = vector.load %arg1[%c0_9, %c3, %c0_10, %c0_11] : memref<1x4x16x16xf32, #tpu.memory_space<vmem>>, vector<1x1x16x16xf32>
    %11 = vector.shape_cast %10 : vector<1x1x16x16xf32> to vector<16x16xf32>
    %12 = arith.addf %8, %11 : vector<16x16xf32>
    %13 = arith.maximumf %9, %11 : vector<16x16xf32>
    %cst = arith.constant 2.500000e-01 : f32
    %14 = vector.broadcast %cst : f32 to vector<16x16xf32>
    %15 = arith.mulf %12, %14 : vector<16x16xf32>
    %cst_12 = arith.constant 0.000000e+00 : f32
    %16 = vector.broadcast %cst_12 : f32 to vector<2x22x22xf32>
    %c0_13 = arith.constant 0 : index
    %c0_14 = arith.constant 0 : index
    %c0_15 = arith.constant 0 : index
    %17 = vector.load %arg4[%c0_13, %c0_14, %c0_15] : memref<2x22x22xf32, #tpu.memory_space<vmem>>, vector<2x22x22xf32>
    tpu.vector_store %arg4[%c0_13, %c0_14, %c0_15], %16 {strides = array<i32>} : memref<2x22x22xf32, #tpu.memory_space<vmem>>, vector<2x22x22xf32>,
    %cst_16 = arith.constant 0.000000e+00 : f32
    %18 = vector.broadcast %cst_16 : f32 to vector<16x3xf32>
    %19 = tpu.concatenate %18, %15, %18 in 1 : vector<16x3xf32>, vector<16x16xf32>, vector<16x3xf32> -> vector<16x22xf32>
    %c0_17 = arith.constant 0 : index
    %c3_18 = arith.constant 3 : index
    %c0_19 = arith.constant 0 : index
    %20 = vector.load %arg4[%c0_17, %c3_18, %c0_19] : memref<2x22x22xf32, #tpu.memory_space<vmem>>, vector<1x16x22xf32>
    %21 = vector.shape_cast %20 : vector<1x16x22xf32> to vector<16x22xf32>
    %22 = vector.shape_cast %19 : vector<16x22xf32> to vector<1x16x22xf32>
    tpu.vector_store %arg4[%c0_17, %c3_18, %c0_19], %22 {strides = array<i32>} : memref<2x22x22xf32, #tpu.memory_space<vmem>>, vector<1x16x22xf32>,
    %23 = tpu.concatenate %18, %13, %18 in 1 : vector<16x3xf32>, vector<16x16xf32>, vector<16x3xf32> -> vector<16x22xf32>
    %c1_20 = arith.constant 1 : index
    %c3_21 = arith.constant 3 : index
    %c0_22 = arith.constant 0 : index
    %24 = vector.load %arg4[%c1_20, %c3_21, %c0_22] : memref<2x22x22xf32, #tpu.memory_space<vmem>>, vector<1x16x22xf32>
    %25 = vector.shape_cast %24 : vector<1x16x22xf32> to vector<16x22xf32>
    %26 = vector.shape_cast %23 : vector<16x22xf32> to vector<1x16x22xf32>
    tpu.vector_store %arg4[%c1_20, %c3_21, %c0_22], %26 {strides = array<i32>} : memref<2x22x22xf32, #tpu.memory_space<vmem>>, vector<1x16x22xf32>,
    %c0_23 = arith.constant 0 : index
    %c0_24 = arith.constant 0 : index
    %c0_25 = arith.constant 0 : index
    %27 = vector.load %arg4[%c0_23, %c0_24, %c0_25] : memref<2x22x22xf32, #tpu.memory_space<vmem>>, vector<1x16x22xf32>
    %28 = vector.shape_cast %27 : vector<1x16x22xf32> to vector<16x22xf32>
    %29 = vector.extract_strided_slice %28 {offsets = [0, 0], sizes = [16, 16], strides = [1, 1]} : vector<16x22xf32> to vector<16x16xf32>
    %c0_26 = arith.constant 0 : index
    %30 = memref.load %arg2[%c0_26] : memref<98xf32, #tpu.memory_space<smem>>
    %31 = vector.broadcast %30 : f32 to vector<16x16xf32>
    %32 = arith.mulf %29, %31 : vector<16x16xf32>
    %33 = vector.extract_strided_slice %28 {offsets = [0, 1], sizes = [16, 16], strides = [1, 1]} : vector<16x22xf32> to vector<16x16xf32>
    %c1_27 = arith.constant 1 : index
    %34 = memref.load %arg2[%c1_27] : memref<98xf32, #tpu.memory_space<smem>>
    %35 = vector.broadcast %34 : f32 to vector<16x16xf32>
    %36 = arith.mulf %33, %35 : vector<16x16xf32>
    %37 = arith.addf %32, %36 : vector<16x16xf32>
    %38 = vector.extract_strided_slice %28 {offsets = [0, 2], sizes = [16, 16], strides = [1, 1]} : vector<16x22xf32> to vector<16x16xf32>
    %c2_28 = arith.constant 2 : index
    %39 = memref.load %arg2[%c2_28] : memref<98xf32, #tpu.memory_space<smem>>
    %40 = vector.broadcast %39 : f32 to vector<16x16xf32>
    %41 = arith.mulf %38, %40 : vector<16x16xf32>
    %42 = arith.addf %37, %41 : vector<16x16xf32>
    %43 = vector.extract_strided_slice %28 {offsets = [0, 3], sizes = [16, 16], strides = [1, 1]} : vector<16x22xf32> to vector<16x16xf32>
    %c3_29 = arith.constant 3 : index
    %44 = memref.load %arg2[%c3_29] : memref<98xf32, #tpu.memory_space<smem>>
    %45 = vector.broadcast %44 : f32 to vector<16x16xf32>
    %46 = arith.mulf %43, %45 : vector<16x16xf32>
    %47 = arith.addf %42, %46 : vector<16x16xf32>
    %48 = vector.extract_strided_slice %28 {offsets = [0, 4], sizes = [16, 16], strides = [1, 1]} : vector<16x22xf32> to vector<16x16xf32>
    %c4 = arith.constant 4 : index
    %49 = memref.load %arg2[%c4] : memref<98xf32, #tpu.memory_space<smem>>
    %50 = vector.broadcast %49 : f32 to vector<16x16xf32>
    %51 = arith.mulf %48, %50 : vector<16x16xf32>
    %52 = arith.addf %47, %51 : vector<16x16xf32>
    %53 = vector.extract_strided_slice %28 {offsets = [0, 5], sizes = [16, 16], strides = [1, 1]} : vector<16x22xf32> to vector<16x16xf32>
    %c5 = arith.constant 5 : index
    %54 = memref.load %arg2[%c5] : memref<98xf32, #tpu.memory_space<smem>>
    %55 = vector.broadcast %54 : f32 to vector<16x16xf32>
    %56 = arith.mulf %53, %55 : vector<16x16xf32>
    %57 = arith.addf %52, %56 : vector<16x16xf32>
    %58 = vector.extract_strided_slice %28 {offsets = [0, 6], sizes = [16, 16], strides = [1, 1]} : vector<16x22xf32> to vector<16x16xf32>
    %c6 = arith.constant 6 : index
    %59 = memref.load %arg2[%c6] : memref<98xf32, #tpu.memory_space<smem>>
    %60 = vector.broadcast %59 : f32 to vector<16x16xf32>
    %61 = arith.mulf %58, %60 : vector<16x16xf32>
    %62 = arith.addf %57, %61 : vector<16x16xf32>
    %c0_30 = arith.constant 0 : index
    %c1_31 = arith.constant 1 : index
    %c0_32 = arith.constant 0 : index
    %63 = vector.load %arg4[%c0_30, %c1_31, %c0_32] : memref<2x22x22xf32, #tpu.memory_space<vmem>>, vector<1x16x22xf32>
    %64 = vector.shape_cast %63 : vector<1x16x22xf32> to vector<16x22xf32>
    %65 = vector.extract_strided_slice %64 {offsets = [0, 0], sizes = [16, 16], strides = [1, 1]} : vector<16x22xf32> to vector<16x16xf32>
    %c7 = arith.constant 7 : index
    %66 = memref.load %arg2[%c7] : memref<98xf32, #tpu.memory_space<smem>>
    %67 = vector.broadcast %66 : f32 to vector<16x16xf32>
    %68 = arith.mulf %65, %67 : vector<16x16xf32>
    %69 = vector.extract_strided_slice %64 {offsets = [0, 1], sizes = [16, 16], strides = [1, 1]} : vector<16x22xf32> to vector<16x16xf32>
    %c8 = arith.constant 8 : index
    %70 = memref.load %arg2[%c8] : memref<98xf32, #tpu.memory_space<smem>>
    %71 = vector.broadcast %70 : f32 to vector<16x16xf32>
    %72 = arith.mulf %69, %71 : vector<16x16xf32>
    %73 = arith.addf %68, %72 : vector<16x16xf32>
    %74 = vector.extract_strided_slice %64 {offsets = [0, 2], sizes = [16, 16], strides = [1, 1]} : vector<16x22xf32> to vector<16x16xf32>
    %c9 = arith.constant 9 : index
    %75 = memref.load %arg2[%c9] : memref<98xf32, #tpu.memory_space<smem>>
    %76 = vector.broadcast %75 : f32 to vector<16x16xf32>
    %77 = arith.mulf %74, %76 : vector<16x16xf32>
    %78 = arith.addf %73, %77 : vector<16x16xf32>
    %79 = vector.extract_strided_slice %64 {offsets = [0, 3], sizes = [16, 16], strides = [1, 1]} : vector<16x22xf32> to vector<16x16xf32>
    %c10 = arith.constant 10 : index
    %80 = memref.load %arg2[%c10] : memref<98xf32, #tpu.memory_space<smem>>
    %81 = vector.broadcast %80 : f32 to vector<16x16xf32>
    %82 = arith.mulf %79, %81 : vector<16x16xf32>
    %83 = arith.addf %78, %82 : vector<16x16xf32>
    %84 = vector.extract_strided_slice %64 {offsets = [0, 4], sizes = [16, 16], strides = [1, 1]} : vector<16x22xf32> to vector<16x16xf32>
    %c11 = arith.constant 11 : index
    %85 = memref.load %arg2[%c11] : memref<98xf32, #tpu.memory_space<smem>>
    %86 = vector.broadcast %85 : f32 to vector<16x16xf32>
    %87 = arith.mulf %84, %86 : vector<16x16xf32>
    %88 = arith.addf %83, %87 : vector<16x16xf32>
    %89 = vector.extract_strided_slice %64 {offsets = [0, 5], sizes = [16, 16], strides = [1, 1]} : vector<16x22xf32> to vector<16x16xf32>
    %c12 = arith.constant 12 : index
    %90 = memref.load %arg2[%c12] : memref<98xf32, #tpu.memory_space<smem>>
    %91 = vector.broadcast %90 : f32 to vector<16x16xf32>
    %92 = arith.mulf %89, %91 : vector<16x16xf32>
    %93 = arith.addf %88, %92 : vector<16x16xf32>
    %94 = vector.extract_strided_slice %64 {offsets = [0, 6], sizes = [16, 16], strides = [1, 1]} : vector<16x22xf32> to vector<16x16xf32>
    %c13 = arith.constant 13 : index
    %95 = memref.load %arg2[%c13] : memref<98xf32, #tpu.memory_space<smem>>
    %96 = vector.broadcast %95 : f32 to vector<16x16xf32>
    %97 = arith.mulf %94, %96 : vector<16x16xf32>
    %98 = arith.addf %93, %97 : vector<16x16xf32>
    %c0_33 = arith.constant 0 : index
    %c2_34 = arith.constant 2 : index
    %c0_35 = arith.constant 0 : index
    %99 = vector.load %arg4[%c0_33, %c2_34, %c0_35] : memref<2x22x22xf32, #tpu.memory_space<vmem>>, vector<1x16x22xf32>
    %100 = vector.shape_cast %99 : vector<1x16x22xf32> to vector<16x22xf32>
    %101 = vector.extract_strided_slice %100 {offsets = [0, 0], sizes = [16, 16], strides = [1, 1]} : vector<16x22xf32> to vector<16x16xf32>
    %c14 = arith.constant 14 : index
    %102 = memref.load %arg2[%c14] : memref<98xf32, #tpu.memory_space<smem>>
    %103 = vector.broadcast %102 : f32 to vector<16x16xf32>
    %104 = arith.mulf %101, %103 : vector<16x16xf32>
    %105 = vector.extract_strided_slice %100 {offsets = [0, 1], sizes = [16, 16], strides = [1, 1]} : vector<16x22xf32> to vector<16x16xf32>
    %c15 = arith.constant 15 : index
    %106 = memref.load %arg2[%c15] : memref<98xf32, #tpu.memory_space<smem>>
    %107 = vector.broadcast %106 : f32 to vector<16x16xf32>
    %108 = arith.mulf %105, %107 : vector<16x16xf32>
    %109 = arith.addf %104, %108 : vector<16x16xf32>
    %110 = vector.extract_strided_slice %100 {offsets = [0, 2], sizes = [16, 16], strides = [1, 1]} : vector<16x22xf32> to vector<16x16xf32>
    %c16 = arith.constant 16 : index
    %111 = memref.load %arg2[%c16] : memref<98xf32, #tpu.memory_space<smem>>
    %112 = vector.broadcast %111 : f32 to vector<16x16xf32>
    %113 = arith.mulf %110, %112 : vector<16x16xf32>
    %114 = arith.addf %109, %113 : vector<16x16xf32>
    %115 = vector.extract_strided_slice %100 {offsets = [0, 3], sizes = [16, 16], strides = [1, 1]} : vector<16x22xf32> to vector<16x16xf32>
    %c17 = arith.constant 17 : index
    %116 = memref.load %arg2[%c17] : memref<98xf32, #tpu.memory_space<smem>>
    %117 = vector.broadcast %116 : f32 to vector<16x16xf32>
    %118 = arith.mulf %115, %117 : vector<16x16xf32>
    %119 = arith.addf %114, %118 : vector<16x16xf32>
    %120 = vector.extract_strided_slice %100 {offsets = [0, 4], sizes = [16, 16], strides = [1, 1]} : vector<16x22xf32> to vector<16x16xf32>
    %c18 = arith.constant 18 : index
    %121 = memref.load %arg2[%c18] : memref<98xf32, #tpu.memory_space<smem>>
    %122 = vector.broadcast %121 : f32 to vector<16x16xf32>
    %123 = arith.mulf %120, %122 : vector<16x16xf32>
    %124 = arith.addf %119, %123 : vector<16x16xf32>
    %125 = vector.extract_strided_slice %100 {offsets = [0, 5], sizes = [16, 16], strides = [1, 1]} : vector<16x22xf32> to vector<16x16xf32>
    %c19 = arith.constant 19 : index
    %126 = memref.load %arg2[%c19] : memref<98xf32, #tpu.memory_space<smem>>
    %127 = vector.broadcast %126 : f32 to vector<16x16xf32>
    %128 = arith.mulf %125, %127 : vector<16x16xf32>
    %129 = arith.addf %124, %128 : vector<16x16xf32>
    %130 = vector.extract_strided_slice %100 {offsets = [0, 6], sizes = [16, 16], strides = [1, 1]} : vector<16x22xf32> to vector<16x16xf32>
    %c20 = arith.constant 20 : index
    %131 = memref.load %arg2[%c20] : memref<98xf32, #tpu.memory_space<smem>>
    %132 = vector.broadcast %131 : f32 to vector<16x16xf32>
    %133 = arith.mulf %130, %132 : vector<16x16xf32>
    %134 = arith.addf %129, %133 : vector<16x16xf32>
    %c0_36 = arith.constant 0 : index
    %c3_37 = arith.constant 3 : index
    %c0_38 = arith.constant 0 : index
    %135 = vector.load %arg4[%c0_36, %c3_37, %c0_38] : memref<2x22x22xf32, #tpu.memory_space<vmem>>, vector<1x16x22xf32>
    %136 = vector.shape_cast %135 : vector<1x16x22xf32> to vector<16x22xf32>
    %137 = vector.extract_strided_slice %136 {offsets = [0, 0], sizes = [16, 16], strides = [1, 1]} : vector<16x22xf32> to vector<16x16xf32>
    %c21 = arith.constant 21 : index
    %138 = memref.load %arg2[%c21] : memref<98xf32, #tpu.memory_space<smem>>
    %139 = vector.broadcast %138 : f32 to vector<16x16xf32>
    %140 = arith.mulf %137, %139 : vector<16x16xf32>
    %141 = vector.extract_strided_slice %136 {offsets = [0, 1], sizes = [16, 16], strides = [1, 1]} : vector<16x22xf32> to vector<16x16xf32>
    %c22 = arith.constant 22 : index
    %142 = memref.load %arg2[%c22] : memref<98xf32, #tpu.memory_space<smem>>
    %143 = vector.broadcast %142 : f32 to vector<16x16xf32>
    %144 = arith.mulf %141, %143 : vector<16x16xf32>
    %145 = arith.addf %140, %144 : vector<16x16xf32>
    %146 = vector.extract_strided_slice %136 {offsets = [0, 2], sizes = [16, 16], strides = [1, 1]} : vector<16x22xf32> to vector<16x16xf32>
    %c23 = arith.constant 23 : index
    %147 = memref.load %arg2[%c23] : memref<98xf32, #tpu.memory_space<smem>>
    %148 = vector.broadcast %147 : f32 to vector<16x16xf32>
    %149 = arith.mulf %146, %148 : vector<16x16xf32>
    %150 = arith.addf %145, %149 : vector<16x16xf32>
    %151 = vector.extract_strided_slice %136 {offsets = [0, 3], sizes = [16, 16], strides = [1, 1]} : vector<16x22xf32> to vector<16x16xf32>
    %c24 = arith.constant 24 : index
    %152 = memref.load %arg2[%c24] : memref<98xf32, #tpu.memory_space<smem>>
    %153 = vector.broadcast %152 : f32 to vector<16x16xf32>
    %154 = arith.mulf %151, %153 : vector<16x16xf32>
    %155 = arith.addf %150, %154 : vector<16x16xf32>
    %156 = vector.extract_strided_slice %136 {offsets = [0, 4], sizes = [16, 16], strides = [1, 1]} : vector<16x22xf32> to vector<16x16xf32>
    %c25 = arith.constant 25 : index
    %157 = memref.load %arg2[%c25] : memref<98xf32, #tpu.memory_space<smem>>
    %158 = vector.broadcast %157 : f32 to vector<16x16xf32>
    %159 = arith.mulf %156, %158 : vector<16x16xf32>
    %160 = arith.addf %155, %159 : vector<16x16xf32>
    %161 = vector.extract_strided_slice %136 {offsets = [0, 5], sizes = [16, 16], strides = [1, 1]} : vector<16x22xf32> to vector<16x16xf32>
    %c26 = arith.constant 26 : index
    %162 = memref.load %arg2[%c26] : memref<98xf32, #tpu.memory_space<smem>>
    %163 = vector.broadcast %162 : f32 to vector<16x16xf32>
    %164 = arith.mulf %161, %163 : vector<16x16xf32>
    %165 = arith.addf %160, %164 : vector<16x16xf32>
    %166 = vector.extract_strided_slice %136 {offsets = [0, 6], sizes = [16, 16], strides = [1, 1]} : vector<16x22xf32> to vector<16x16xf32>
    %c27 = arith.constant 27 : index
    %167 = memref.load %arg2[%c27] : memref<98xf32, #tpu.memory_space<smem>>
    %168 = vector.broadcast %167 : f32 to vector<16x16xf32>
    %169 = arith.mulf %166, %168 : vector<16x16xf32>
    %170 = arith.addf %165, %169 : vector<16x16xf32>
    %c0_39 = arith.constant 0 : index
    %c4_40 = arith.constant 4 : index
    %c0_41 = arith.constant 0 : index
    %171 = vector.load %arg4[%c0_39, %c4_40, %c0_41] : memref<2x22x22xf32, #tpu.memory_space<vmem>>, vector<1x16x22xf32>
    %172 = vector.shape_cast %171 : vector<1x16x22xf32> to vector<16x22xf32>
    %173 = vector.extract_strided_slice %172 {offsets = [0, 0], sizes = [16, 16], strides = [1, 1]} : vector<16x22xf32> to vector<16x16xf32>
    %c28 = arith.constant 28 : index
    %174 = memref.load %arg2[%c28] : memref<98xf32, #tpu.memory_space<smem>>
    %175 = vector.broadcast %174 : f32 to vector<16x16xf32>
    %176 = arith.mulf %173, %175 : vector<16x16xf32>
    %177 = vector.extract_strided_slice %172 {offsets = [0, 1], sizes = [16, 16], strides = [1, 1]} : vector<16x22xf32> to vector<16x16xf32>
    %c29 = arith.constant 29 : index
    %178 = memref.load %arg2[%c29] : memref<98xf32, #tpu.memory_space<smem>>
    %179 = vector.broadcast %178 : f32 to vector<16x16xf32>
    %180 = arith.mulf %177, %179 : vector<16x16xf32>
    %181 = arith.addf %176, %180 : vector<16x16xf32>
    %182 = vector.extract_strided_slice %172 {offsets = [0, 2], sizes = [16, 16], strides = [1, 1]} : vector<16x22xf32> to vector<16x16xf32>
    %c30 = arith.constant 30 : index
    %183 = memref.load %arg2[%c30] : memref<98xf32, #tpu.memory_space<smem>>
    %184 = vector.broadcast %183 : f32 to vector<16x16xf32>
    %185 = arith.mulf %182, %184 : vector<16x16xf32>
    %186 = arith.addf %181, %185 : vector<16x16xf32>
    %187 = vector.extract_strided_slice %172 {offsets = [0, 3], sizes = [16, 16], strides = [1, 1]} : vector<16x22xf32> to vector<16x16xf32>
    %c31 = arith.constant 31 : index
    %188 = memref.load %arg2[%c31] : memref<98xf32, #tpu.memory_space<smem>>
    %189 = vector.broadcast %188 : f32 to vector<16x16xf32>
    %190 = arith.mulf %187, %189 : vector<16x16xf32>
    %191 = arith.addf %186, %190 : vector<16x16xf32>
    %192 = vector.extract_strided_slice %172 {offsets = [0, 4], sizes = [16, 16], strides = [1, 1]} : vector<16x22xf32> to vector<16x16xf32>
    %c32 = arith.constant 32 : index
    %193 = memref.load %arg2[%c32] : memref<98xf32, #tpu.memory_space<smem>>
    %194 = vector.broadcast %193 : f32 to vector<16x16xf32>
    %195 = arith.mulf %192, %194 : vector<16x16xf32>
    %196 = arith.addf %191, %195 : vector<16x16xf32>
    %197 = vector.extract_strided_slice %172 {offsets = [0, 5], sizes = [16, 16], strides = [1, 1]} : vector<16x22xf32> to vector<16x16xf32>
    %c33 = arith.constant 33 : index
    %198 = memref.load %arg2[%c33] : memref<98xf32, #tpu.memory_space<smem>>
    %199 = vector.broadcast %198 : f32 to vector<16x16xf32>
    %200 = arith.mulf %197, %199 : vector<16x16xf32>
    %201 = arith.addf %196, %200 : vector<16x16xf32>
    %202 = vector.extract_strided_slice %172 {offsets = [0, 6], sizes = [16, 16], strides = [1, 1]} : vector<16x22xf32> to vector<16x16xf32>
    %c34 = arith.constant 34 : index
    %203 = memref.load %arg2[%c34] : memref<98xf32, #tpu.memory_space<smem>>
    %204 = vector.broadcast %203 : f32 to vector<16x16xf32>
    %205 = arith.mulf %202, %204 : vector<16x16xf32>
    %206 = arith.addf %201, %205 : vector<16x16xf32>
    %c0_42 = arith.constant 0 : index
    %c5_43 = arith.constant 5 : index
    %c0_44 = arith.constant 0 : index
    %207 = vector.load %arg4[%c0_42, %c5_43, %c0_44] : memref<2x22x22xf32, #tpu.memory_space<vmem>>, vector<1x16x22xf32>
    %208 = vector.shape_cast %207 : vector<1x16x22xf32> to vector<16x22xf32>
    %209 = vector.extract_strided_slice %208 {offsets = [0, 0], sizes = [16, 16], strides = [1, 1]} : vector<16x22xf32> to vector<16x16xf32>
    %c35 = arith.constant 35 : index
    %210 = memref.load %arg2[%c35] : memref<98xf32, #tpu.memory_space<smem>>
    %211 = vector.broadcast %210 : f32 to vector<16x16xf32>
    %212 = arith.mulf %209, %211 : vector<16x16xf32>
    %213 = vector.extract_strided_slice %208 {offsets = [0, 1], sizes = [16, 16], strides = [1, 1]} : vector<16x22xf32> to vector<16x16xf32>
    %c36 = arith.constant 36 : index
    %214 = memref.load %arg2[%c36] : memref<98xf32, #tpu.memory_space<smem>>
    %215 = vector.broadcast %214 : f32 to vector<16x16xf32>
    %216 = arith.mulf %213, %215 : vector<16x16xf32>
    %217 = arith.addf %212, %216 : vector<16x16xf32>
    %218 = vector.extract_strided_slice %208 {offsets = [0, 2], sizes = [16, 16], strides = [1, 1]} : vector<16x22xf32> to vector<16x16xf32>
    %c37 = arith.constant 37 : index
    %219 = memref.load %arg2[%c37] : memref<98xf32, #tpu.memory_space<smem>>
    %220 = vector.broadcast %219 : f32 to vector<16x16xf32>
    %221 = arith.mulf %218, %220 : vector<16x16xf32>
    %222 = arith.addf %217, %221 : vector<16x16xf32>
    %223 = vector.extract_strided_slice %208 {offsets = [0, 3], sizes = [16, 16], strides = [1, 1]} : vector<16x22xf32> to vector<16x16xf32>
    %c38 = arith.constant 38 : index
    %224 = memref.load %arg2[%c38] : memref<98xf32, #tpu.memory_space<smem>>
    %225 = vector.broadcast %224 : f32 to vector<16x16xf32>
    %226 = arith.mulf %223, %225 : vector<16x16xf32>
    %227 = arith.addf %222, %226 : vector<16x16xf32>
    %228 = vector.extract_strided_slice %208 {offsets = [0, 4], sizes = [16, 16], strides = [1, 1]} : vector<16x22xf32> to vector<16x16xf32>
    %c39 = arith.constant 39 : index
    %229 = memref.load %arg2[%c39] : memref<98xf32, #tpu.memory_space<smem>>
    %230 = vector.broadcast %229 : f32 to vector<16x16xf32>
    %231 = arith.mulf %228, %230 : vector<16x16xf32>
    %232 = arith.addf %227, %231 : vector<16x16xf32>
    %233 = vector.extract_strided_slice %208 {offsets = [0, 5], sizes = [16, 16], strides = [1, 1]} : vector<16x22xf32> to vector<16x16xf32>
    %c40 = arith.constant 40 : index
    %234 = memref.load %arg2[%c40] : memref<98xf32, #tpu.memory_space<smem>>
    %235 = vector.broadcast %234 : f32 to vector<16x16xf32>
    %236 = arith.mulf %233, %235 : vector<16x16xf32>
    %237 = arith.addf %232, %236 : vector<16x16xf32>
    %238 = vector.extract_strided_slice %208 {offsets = [0, 6], sizes = [16, 16], strides = [1, 1]} : vector<16x22xf32> to vector<16x16xf32>
    %c41 = arith.constant 41 : index
    %239 = memref.load %arg2[%c41] : memref<98xf32, #tpu.memory_space<smem>>
    %240 = vector.broadcast %239 : f32 to vector<16x16xf32>
    %241 = arith.mulf %238, %240 : vector<16x16xf32>
    %242 = arith.addf %237, %241 : vector<16x16xf32>
    %c0_45 = arith.constant 0 : index
    %c6_46 = arith.constant 6 : index
    %c0_47 = arith.constant 0 : index
    %243 = vector.load %arg4[%c0_45, %c6_46, %c0_47] : memref<2x22x22xf32, #tpu.memory_space<vmem>>, vector<1x16x22xf32>
    %244 = vector.shape_cast %243 : vector<1x16x22xf32> to vector<16x22xf32>
    %245 = vector.extract_strided_slice %244 {offsets = [0, 0], sizes = [16, 16], strides = [1, 1]} : vector<16x22xf32> to vector<16x16xf32>
    %c42 = arith.constant 42 : index
    %246 = memref.load %arg2[%c42] : memref<98xf32, #tpu.memory_space<smem>>
    %247 = vector.broadcast %246 : f32 to vector<16x16xf32>
    %248 = arith.mulf %245, %247 : vector<16x16xf32>
    %249 = vector.extract_strided_slice %244 {offsets = [0, 1], sizes = [16, 16], strides = [1, 1]} : vector<16x22xf32> to vector<16x16xf32>
    %c43 = arith.constant 43 : index
    %250 = memref.load %arg2[%c43] : memref<98xf32, #tpu.memory_space<smem>>
    %251 = vector.broadcast %250 : f32 to vector<16x16xf32>
    %252 = arith.mulf %249, %251 : vector<16x16xf32>
    %253 = arith.addf %248, %252 : vector<16x16xf32>
    %254 = vector.extract_strided_slice %244 {offsets = [0, 2], sizes = [16, 16], strides = [1, 1]} : vector<16x22xf32> to vector<16x16xf32>
    %c44 = arith.constant 44 : index
    %255 = memref.load %arg2[%c44] : memref<98xf32, #tpu.memory_space<smem>>
    %256 = vector.broadcast %255 : f32 to vector<16x16xf32>
    %257 = arith.mulf %254, %256 : vector<16x16xf32>
    %258 = arith.addf %253, %257 : vector<16x16xf32>
    %259 = vector.extract_strided_slice %244 {offsets = [0, 3], sizes = [16, 16], strides = [1, 1]} : vector<16x22xf32> to vector<16x16xf32>
    %c45 = arith.constant 45 : index
    %260 = memref.load %arg2[%c45] : memref<98xf32, #tpu.memory_space<smem>>
    %261 = vector.broadcast %260 : f32 to vector<16x16xf32>
    %262 = arith.mulf %259, %261 : vector<16x16xf32>
    %263 = arith.addf %258, %262 : vector<16x16xf32>
    %264 = vector.extract_strided_slice %244 {offsets = [0, 4], sizes = [16, 16], strides = [1, 1]} : vector<16x22xf32> to vector<16x16xf32>
    %c46 = arith.constant 46 : index
    %265 = memref.load %arg2[%c46] : memref<98xf32, #tpu.memory_space<smem>>
    %266 = vector.broadcast %265 : f32 to vector<16x16xf32>
    %267 = arith.mulf %264, %266 : vector<16x16xf32>
    %268 = arith.addf %263, %267 : vector<16x16xf32>
    %269 = vector.extract_strided_slice %244 {offsets = [0, 5], sizes = [16, 16], strides = [1, 1]} : vector<16x22xf32> to vector<16x16xf32>
    %c47 = arith.constant 47 : index
    %270 = memref.load %arg2[%c47] : memref<98xf32, #tpu.memory_space<smem>>
    %271 = vector.broadcast %270 : f32 to vector<16x16xf32>
    %272 = arith.mulf %269, %271 : vector<16x16xf32>
    %273 = arith.addf %268, %272 : vector<16x16xf32>
    %274 = vector.extract_strided_slice %244 {offsets = [0, 6], sizes = [16, 16], strides = [1, 1]} : vector<16x22xf32> to vector<16x16xf32>
    %c48 = arith.constant 48 : index
    %275 = memref.load %arg2[%c48] : memref<98xf32, #tpu.memory_space<smem>>
    %276 = vector.broadcast %275 : f32 to vector<16x16xf32>
    %277 = arith.mulf %274, %276 : vector<16x16xf32>
    %278 = arith.addf %273, %277 : vector<16x16xf32>
    %c1_48 = arith.constant 1 : index
    %c0_49 = arith.constant 0 : index
    %c0_50 = arith.constant 0 : index
    %279 = vector.load %arg4[%c1_48, %c0_49, %c0_50] : memref<2x22x22xf32, #tpu.memory_space<vmem>>, vector<1x16x22xf32>
    %280 = vector.shape_cast %279 : vector<1x16x22xf32> to vector<16x22xf32>
    %281 = vector.extract_strided_slice %280 {offsets = [0, 0], sizes = [16, 16], strides = [1, 1]} : vector<16x22xf32> to vector<16x16xf32>
    %c49 = arith.constant 49 : index
    %282 = memref.load %arg2[%c49] : memref<98xf32, #tpu.memory_space<smem>>
    %283 = vector.broadcast %282 : f32 to vector<16x16xf32>
    %284 = arith.mulf %281, %283 : vector<16x16xf32>
    %285 = vector.extract_strided_slice %280 {offsets = [0, 1], sizes = [16, 16], strides = [1, 1]} : vector<16x22xf32> to vector<16x16xf32>
    %c50 = arith.constant 50 : index
    %286 = memref.load %arg2[%c50] : memref<98xf32, #tpu.memory_space<smem>>
    %287 = vector.broadcast %286 : f32 to vector<16x16xf32>
    %288 = arith.mulf %285, %287 : vector<16x16xf32>
    %289 = arith.addf %284, %288 : vector<16x16xf32>
    %290 = vector.extract_strided_slice %280 {offsets = [0, 2], sizes = [16, 16], strides = [1, 1]} : vector<16x22xf32> to vector<16x16xf32>
    %c51 = arith.constant 51 : index
    %291 = memref.load %arg2[%c51] : memref<98xf32, #tpu.memory_space<smem>>
    %292 = vector.broadcast %291 : f32 to vector<16x16xf32>
    %293 = arith.mulf %290, %292 : vector<16x16xf32>
    %294 = arith.addf %289, %293 : vector<16x16xf32>
    %295 = vector.extract_strided_slice %280 {offsets = [0, 3], sizes = [16, 16], strides = [1, 1]} : vector<16x22xf32> to vector<16x16xf32>
    %c52 = arith.constant 52 : index
    %296 = memref.load %arg2[%c52] : memref<98xf32, #tpu.memory_space<smem>>
    %297 = vector.broadcast %296 : f32 to vector<16x16xf32>
    %298 = arith.mulf %295, %297 : vector<16x16xf32>
    %299 = arith.addf %294, %298 : vector<16x16xf32>
    %300 = vector.extract_strided_slice %280 {offsets = [0, 4], sizes = [16, 16], strides = [1, 1]} : vector<16x22xf32> to vector<16x16xf32>
    %c53 = arith.constant 53 : index
    %301 = memref.load %arg2[%c53] : memref<98xf32, #tpu.memory_space<smem>>
    %302 = vector.broadcast %301 : f32 to vector<16x16xf32>
    %303 = arith.mulf %300, %302 : vector<16x16xf32>
    %304 = arith.addf %299, %303 : vector<16x16xf32>
    %305 = vector.extract_strided_slice %280 {offsets = [0, 5], sizes = [16, 16], strides = [1, 1]} : vector<16x22xf32> to vector<16x16xf32>
    %c54 = arith.constant 54 : index
    %306 = memref.load %arg2[%c54] : memref<98xf32, #tpu.memory_space<smem>>
    %307 = vector.broadcast %306 : f32 to vector<16x16xf32>
    %308 = arith.mulf %305, %307 : vector<16x16xf32>
    %309 = arith.addf %304, %308 : vector<16x16xf32>
    %310 = vector.extract_strided_slice %280 {offsets = [0, 6], sizes = [16, 16], strides = [1, 1]} : vector<16x22xf32> to vector<16x16xf32>
    %c55 = arith.constant 55 : index
    %311 = memref.load %arg2[%c55] : memref<98xf32, #tpu.memory_space<smem>>
    %312 = vector.broadcast %311 : f32 to vector<16x16xf32>
    %313 = arith.mulf %310, %312 : vector<16x16xf32>
    %314 = arith.addf %309, %313 : vector<16x16xf32>
    %c1_51 = arith.constant 1 : index
    %c1_52 = arith.constant 1 : index
    %c0_53 = arith.constant 0 : index
    %315 = vector.load %arg4[%c1_51, %c1_52, %c0_53] : memref<2x22x22xf32, #tpu.memory_space<vmem>>, vector<1x16x22xf32>
    %316 = vector.shape_cast %315 : vector<1x16x22xf32> to vector<16x22xf32>
    %317 = vector.extract_strided_slice %316 {offsets = [0, 0], sizes = [16, 16], strides = [1, 1]} : vector<16x22xf32> to vector<16x16xf32>
    %c56 = arith.constant 56 : index
    %318 = memref.load %arg2[%c56] : memref<98xf32, #tpu.memory_space<smem>>
    %319 = vector.broadcast %318 : f32 to vector<16x16xf32>
    %320 = arith.mulf %317, %319 : vector<16x16xf32>
    %321 = vector.extract_strided_slice %316 {offsets = [0, 1], sizes = [16, 16], strides = [1, 1]} : vector<16x22xf32> to vector<16x16xf32>
    %c57 = arith.constant 57 : index
    %322 = memref.load %arg2[%c57] : memref<98xf32, #tpu.memory_space<smem>>
    %323 = vector.broadcast %322 : f32 to vector<16x16xf32>
    %324 = arith.mulf %321, %323 : vector<16x16xf32>
    %325 = arith.addf %320, %324 : vector<16x16xf32>
    %326 = vector.extract_strided_slice %316 {offsets = [0, 2], sizes = [16, 16], strides = [1, 1]} : vector<16x22xf32> to vector<16x16xf32>
    %c58 = arith.constant 58 : index
    %327 = memref.load %arg2[%c58] : memref<98xf32, #tpu.memory_space<smem>>
    %328 = vector.broadcast %327 : f32 to vector<16x16xf32>
    %329 = arith.mulf %326, %328 : vector<16x16xf32>
    %330 = arith.addf %325, %329 : vector<16x16xf32>
    %331 = vector.extract_strided_slice %316 {offsets = [0, 3], sizes = [16, 16], strides = [1, 1]} : vector<16x22xf32> to vector<16x16xf32>
    %c59 = arith.constant 59 : index
    %332 = memref.load %arg2[%c59] : memref<98xf32, #tpu.memory_space<smem>>
    %333 = vector.broadcast %332 : f32 to vector<16x16xf32>
    %334 = arith.mulf %331, %333 : vector<16x16xf32>
    %335 = arith.addf %330, %334 : vector<16x16xf32>
    %336 = vector.extract_strided_slice %316 {offsets = [0, 4], sizes = [16, 16], strides = [1, 1]} : vector<16x22xf32> to vector<16x16xf32>
    %c60 = arith.constant 60 : index
    %337 = memref.load %arg2[%c60] : memref<98xf32, #tpu.memory_space<smem>>
    %338 = vector.broadcast %337 : f32 to vector<16x16xf32>
    %339 = arith.mulf %336, %338 : vector<16x16xf32>
    %340 = arith.addf %335, %339 : vector<16x16xf32>
    %341 = vector.extract_strided_slice %316 {offsets = [0, 5], sizes = [16, 16], strides = [1, 1]} : vector<16x22xf32> to vector<16x16xf32>
    %c61 = arith.constant 61 : index
    %342 = memref.load %arg2[%c61] : memref<98xf32, #tpu.memory_space<smem>>
    %343 = vector.broadcast %342 : f32 to vector<16x16xf32>
    %344 = arith.mulf %341, %343 : vector<16x16xf32>
    %345 = arith.addf %340, %344 : vector<16x16xf32>
    %346 = vector.extract_strided_slice %316 {offsets = [0, 6], sizes = [16, 16], strides = [1, 1]} : vector<16x22xf32> to vector<16x16xf32>
    %c62 = arith.constant 62 : index
    %347 = memref.load %arg2[%c62] : memref<98xf32, #tpu.memory_space<smem>>
    %348 = vector.broadcast %347 : f32 to vector<16x16xf32>
    %349 = arith.mulf %346, %348 : vector<16x16xf32>
    %350 = arith.addf %345, %349 : vector<16x16xf32>
    %c1_54 = arith.constant 1 : index
    %c2_55 = arith.constant 2 : index
    %c0_56 = arith.constant 0 : index
    %351 = vector.load %arg4[%c1_54, %c2_55, %c0_56] : memref<2x22x22xf32, #tpu.memory_space<vmem>>, vector<1x16x22xf32>
    %352 = vector.shape_cast %351 : vector<1x16x22xf32> to vector<16x22xf32>
    %353 = vector.extract_strided_slice %352 {offsets = [0, 0], sizes = [16, 16], strides = [1, 1]} : vector<16x22xf32> to vector<16x16xf32>
    %c63 = arith.constant 63 : index
    %354 = memref.load %arg2[%c63] : memref<98xf32, #tpu.memory_space<smem>>
    %355 = vector.broadcast %354 : f32 to vector<16x16xf32>
    %356 = arith.mulf %353, %355 : vector<16x16xf32>
    %357 = vector.extract_strided_slice %352 {offsets = [0, 1], sizes = [16, 16], strides = [1, 1]} : vector<16x22xf32> to vector<16x16xf32>
    %c64 = arith.constant 64 : index
    %358 = memref.load %arg2[%c64] : memref<98xf32, #tpu.memory_space<smem>>
    %359 = vector.broadcast %358 : f32 to vector<16x16xf32>
    %360 = arith.mulf %357, %359 : vector<16x16xf32>
    %361 = arith.addf %356, %360 : vector<16x16xf32>
    %362 = vector.extract_strided_slice %352 {offsets = [0, 2], sizes = [16, 16], strides = [1, 1]} : vector<16x22xf32> to vector<16x16xf32>
    %c65 = arith.constant 65 : index
    %363 = memref.load %arg2[%c65] : memref<98xf32, #tpu.memory_space<smem>>
    %364 = vector.broadcast %363 : f32 to vector<16x16xf32>
    %365 = arith.mulf %362, %364 : vector<16x16xf32>
    %366 = arith.addf %361, %365 : vector<16x16xf32>
    %367 = vector.extract_strided_slice %352 {offsets = [0, 3], sizes = [16, 16], strides = [1, 1]} : vector<16x22xf32> to vector<16x16xf32>
    %c66 = arith.constant 66 : index
    %368 = memref.load %arg2[%c66] : memref<98xf32, #tpu.memory_space<smem>>
    %369 = vector.broadcast %368 : f32 to vector<16x16xf32>
    %370 = arith.mulf %367, %369 : vector<16x16xf32>
    %371 = arith.addf %366, %370 : vector<16x16xf32>
    %372 = vector.extract_strided_slice %352 {offsets = [0, 4], sizes = [16, 16], strides = [1, 1]} : vector<16x22xf32> to vector<16x16xf32>
    %c67 = arith.constant 67 : index
    %373 = memref.load %arg2[%c67] : memref<98xf32, #tpu.memory_space<smem>>
    %374 = vector.broadcast %373 : f32 to vector<16x16xf32>
    %375 = arith.mulf %372, %374 : vector<16x16xf32>
    %376 = arith.addf %371, %375 : vector<16x16xf32>
    %377 = vector.extract_strided_slice %352 {offsets = [0, 5], sizes = [16, 16], strides = [1, 1]} : vector<16x22xf32> to vector<16x16xf32>
    %c68 = arith.constant 68 : index
    %378 = memref.load %arg2[%c68] : memref<98xf32, #tpu.memory_space<smem>>
    %379 = vector.broadcast %378 : f32 to vector<16x16xf32>
    %380 = arith.mulf %377, %379 : vector<16x16xf32>
    %381 = arith.addf %376, %380 : vector<16x16xf32>
    %382 = vector.extract_strided_slice %352 {offsets = [0, 6], sizes = [16, 16], strides = [1, 1]} : vector<16x22xf32> to vector<16x16xf32>
    %c69 = arith.constant 69 : index
    %383 = memref.load %arg2[%c69] : memref<98xf32, #tpu.memory_space<smem>>
    %384 = vector.broadcast %383 : f32 to vector<16x16xf32>
    %385 = arith.mulf %382, %384 : vector<16x16xf32>
    %386 = arith.addf %381, %385 : vector<16x16xf32>
    %c1_57 = arith.constant 1 : index
    %c3_58 = arith.constant 3 : index
    %c0_59 = arith.constant 0 : index
    %387 = vector.load %arg4[%c1_57, %c3_58, %c0_59] : memref<2x22x22xf32, #tpu.memory_space<vmem>>, vector<1x16x22xf32>
    %388 = vector.shape_cast %387 : vector<1x16x22xf32> to vector<16x22xf32>
    %389 = vector.extract_strided_slice %388 {offsets = [0, 0], sizes = [16, 16], strides = [1, 1]} : vector<16x22xf32> to vector<16x16xf32>
    %c70 = arith.constant 70 : index
    %390 = memref.load %arg2[%c70] : memref<98xf32, #tpu.memory_space<smem>>
    %391 = vector.broadcast %390 : f32 to vector<16x16xf32>
    %392 = arith.mulf %389, %391 : vector<16x16xf32>
    %393 = vector.extract_strided_slice %388 {offsets = [0, 1], sizes = [16, 16], strides = [1, 1]} : vector<16x22xf32> to vector<16x16xf32>
    %c71 = arith.constant 71 : index
    %394 = memref.load %arg2[%c71] : memref<98xf32, #tpu.memory_space<smem>>
    %395 = vector.broadcast %394 : f32 to vector<16x16xf32>
    %396 = arith.mulf %393, %395 : vector<16x16xf32>
    %397 = arith.addf %392, %396 : vector<16x16xf32>
    %398 = vector.extract_strided_slice %388 {offsets = [0, 2], sizes = [16, 16], strides = [1, 1]} : vector<16x22xf32> to vector<16x16xf32>
    %c72 = arith.constant 72 : index
    %399 = memref.load %arg2[%c72] : memref<98xf32, #tpu.memory_space<smem>>
    %400 = vector.broadcast %399 : f32 to vector<16x16xf32>
    %401 = arith.mulf %398, %400 : vector<16x16xf32>
    %402 = arith.addf %397, %401 : vector<16x16xf32>
    %403 = vector.extract_strided_slice %388 {offsets = [0, 3], sizes = [16, 16], strides = [1, 1]} : vector<16x22xf32> to vector<16x16xf32>
    %c73 = arith.constant 73 : index
    %404 = memref.load %arg2[%c73] : memref<98xf32, #tpu.memory_space<smem>>
    %405 = vector.broadcast %404 : f32 to vector<16x16xf32>
    %406 = arith.mulf %403, %405 : vector<16x16xf32>
    %407 = arith.addf %402, %406 : vector<16x16xf32>
    %408 = vector.extract_strided_slice %388 {offsets = [0, 4], sizes = [16, 16], strides = [1, 1]} : vector<16x22xf32> to vector<16x16xf32>
    %c74 = arith.constant 74 : index
    %409 = memref.load %arg2[%c74] : memref<98xf32, #tpu.memory_space<smem>>
    %410 = vector.broadcast %409 : f32 to vector<16x16xf32>
    %411 = arith.mulf %408, %410 : vector<16x16xf32>
    %412 = arith.addf %407, %411 : vector<16x16xf32>
    %413 = vector.extract_strided_slice %388 {offsets = [0, 5], sizes = [16, 16], strides = [1, 1]} : vector<16x22xf32> to vector<16x16xf32>
    %c75 = arith.constant 75 : index
    %414 = memref.load %arg2[%c75] : memref<98xf32, #tpu.memory_space<smem>>
    %415 = vector.broadcast %414 : f32 to vector<16x16xf32>
    %416 = arith.mulf %413, %415 : vector<16x16xf32>
    %417 = arith.addf %412, %416 : vector<16x16xf32>
    %418 = vector.extract_strided_slice %388 {offsets = [0, 6], sizes = [16, 16], strides = [1, 1]} : vector<16x22xf32> to vector<16x16xf32>
    %c76 = arith.constant 76 : index
    %419 = memref.load %arg2[%c76] : memref<98xf32, #tpu.memory_space<smem>>
    %420 = vector.broadcast %419 : f32 to vector<16x16xf32>
    %421 = arith.mulf %418, %420 : vector<16x16xf32>
    %422 = arith.addf %417, %421 : vector<16x16xf32>
    %c1_60 = arith.constant 1 : index
    %c4_61 = arith.constant 4 : index
    %c0_62 = arith.constant 0 : index
    %423 = vector.load %arg4[%c1_60, %c4_61, %c0_62] : memref<2x22x22xf32, #tpu.memory_space<vmem>>, vector<1x16x22xf32>
    %424 = vector.shape_cast %423 : vector<1x16x22xf32> to vector<16x22xf32>
    %425 = vector.extract_strided_slice %424 {offsets = [0, 0], sizes = [16, 16], strides = [1, 1]} : vector<16x22xf32> to vector<16x16xf32>
    %c77 = arith.constant 77 : index
    %426 = memref.load %arg2[%c77] : memref<98xf32, #tpu.memory_space<smem>>
    %427 = vector.broadcast %426 : f32 to vector<16x16xf32>
    %428 = arith.mulf %425, %427 : vector<16x16xf32>
    %429 = vector.extract_strided_slice %424 {offsets = [0, 1], sizes = [16, 16], strides = [1, 1]} : vector<16x22xf32> to vector<16x16xf32>
    %c78 = arith.constant 78 : index
    %430 = memref.load %arg2[%c78] : memref<98xf32, #tpu.memory_space<smem>>
    %431 = vector.broadcast %430 : f32 to vector<16x16xf32>
    %432 = arith.mulf %429, %431 : vector<16x16xf32>
    %433 = arith.addf %428, %432 : vector<16x16xf32>
    %434 = vector.extract_strided_slice %424 {offsets = [0, 2], sizes = [16, 16], strides = [1, 1]} : vector<16x22xf32> to vector<16x16xf32>
    %c79 = arith.constant 79 : index
    %435 = memref.load %arg2[%c79] : memref<98xf32, #tpu.memory_space<smem>>
    %436 = vector.broadcast %435 : f32 to vector<16x16xf32>
    %437 = arith.mulf %434, %436 : vector<16x16xf32>
    %438 = arith.addf %433, %437 : vector<16x16xf32>
    %439 = vector.extract_strided_slice %424 {offsets = [0, 3], sizes = [16, 16], strides = [1, 1]} : vector<16x22xf32> to vector<16x16xf32>
    %c80 = arith.constant 80 : index
    %440 = memref.load %arg2[%c80] : memref<98xf32, #tpu.memory_space<smem>>
    %441 = vector.broadcast %440 : f32 to vector<16x16xf32>
    %442 = arith.mulf %439, %441 : vector<16x16xf32>
    %443 = arith.addf %438, %442 : vector<16x16xf32>
    %444 = vector.extract_strided_slice %424 {offsets = [0, 4], sizes = [16, 16], strides = [1, 1]} : vector<16x22xf32> to vector<16x16xf32>
    %c81 = arith.constant 81 : index
    %445 = memref.load %arg2[%c81] : memref<98xf32, #tpu.memory_space<smem>>
    %446 = vector.broadcast %445 : f32 to vector<16x16xf32>
    %447 = arith.mulf %444, %446 : vector<16x16xf32>
    %448 = arith.addf %443, %447 : vector<16x16xf32>
    %449 = vector.extract_strided_slice %424 {offsets = [0, 5], sizes = [16, 16], strides = [1, 1]} : vector<16x22xf32> to vector<16x16xf32>
    %c82 = arith.constant 82 : index
    %450 = memref.load %arg2[%c82] : memref<98xf32, #tpu.memory_space<smem>>
    %451 = vector.broadcast %450 : f32 to vector<16x16xf32>
    %452 = arith.mulf %449, %451 : vector<16x16xf32>
    %453 = arith.addf %448, %452 : vector<16x16xf32>
    %454 = vector.extract_strided_slice %424 {offsets = [0, 6], sizes = [16, 16], strides = [1, 1]} : vector<16x22xf32> to vector<16x16xf32>
    %c83 = arith.constant 83 : index
    %455 = memref.load %arg2[%c83] : memref<98xf32, #tpu.memory_space<smem>>
    %456 = vector.broadcast %455 : f32 to vector<16x16xf32>
    %457 = arith.mulf %454, %456 : vector<16x16xf32>
    %458 = arith.addf %453, %457 : vector<16x16xf32>
    %c1_63 = arith.constant 1 : index
    %c5_64 = arith.constant 5 : index
    %c0_65 = arith.constant 0 : index
    %459 = vector.load %arg4[%c1_63, %c5_64, %c0_65] : memref<2x22x22xf32, #tpu.memory_space<vmem>>, vector<1x16x22xf32>
    %460 = vector.shape_cast %459 : vector<1x16x22xf32> to vector<16x22xf32>
    %461 = vector.extract_strided_slice %460 {offsets = [0, 0], sizes = [16, 16], strides = [1, 1]} : vector<16x22xf32> to vector<16x16xf32>
    %c84 = arith.constant 84 : index
    %462 = memref.load %arg2[%c84] : memref<98xf32, #tpu.memory_space<smem>>
    %463 = vector.broadcast %462 : f32 to vector<16x16xf32>
    %464 = arith.mulf %461, %463 : vector<16x16xf32>
    %465 = vector.extract_strided_slice %460 {offsets = [0, 1], sizes = [16, 16], strides = [1, 1]} : vector<16x22xf32> to vector<16x16xf32>
    %c85 = arith.constant 85 : index
    %466 = memref.load %arg2[%c85] : memref<98xf32, #tpu.memory_space<smem>>
    %467 = vector.broadcast %466 : f32 to vector<16x16xf32>
    %468 = arith.mulf %465, %467 : vector<16x16xf32>
    %469 = arith.addf %464, %468 : vector<16x16xf32>
    %470 = vector.extract_strided_slice %460 {offsets = [0, 2], sizes = [16, 16], strides = [1, 1]} : vector<16x22xf32> to vector<16x16xf32>
    %c86 = arith.constant 86 : index
    %471 = memref.load %arg2[%c86] : memref<98xf32, #tpu.memory_space<smem>>
    %472 = vector.broadcast %471 : f32 to vector<16x16xf32>
    %473 = arith.mulf %470, %472 : vector<16x16xf32>
    %474 = arith.addf %469, %473 : vector<16x16xf32>
    %475 = vector.extract_strided_slice %460 {offsets = [0, 3], sizes = [16, 16], strides = [1, 1]} : vector<16x22xf32> to vector<16x16xf32>
    %c87 = arith.constant 87 : index
    %476 = memref.load %arg2[%c87] : memref<98xf32, #tpu.memory_space<smem>>
    %477 = vector.broadcast %476 : f32 to vector<16x16xf32>
    %478 = arith.mulf %475, %477 : vector<16x16xf32>
    %479 = arith.addf %474, %478 : vector<16x16xf32>
    %480 = vector.extract_strided_slice %460 {offsets = [0, 4], sizes = [16, 16], strides = [1, 1]} : vector<16x22xf32> to vector<16x16xf32>
    %c88 = arith.constant 88 : index
    %481 = memref.load %arg2[%c88] : memref<98xf32, #tpu.memory_space<smem>>
    %482 = vector.broadcast %481 : f32 to vector<16x16xf32>
    %483 = arith.mulf %480, %482 : vector<16x16xf32>
    %484 = arith.addf %479, %483 : vector<16x16xf32>
    %485 = vector.extract_strided_slice %460 {offsets = [0, 5], sizes = [16, 16], strides = [1, 1]} : vector<16x22xf32> to vector<16x16xf32>
    %c89 = arith.constant 89 : index
    %486 = memref.load %arg2[%c89] : memref<98xf32, #tpu.memory_space<smem>>
    %487 = vector.broadcast %486 : f32 to vector<16x16xf32>
    %488 = arith.mulf %485, %487 : vector<16x16xf32>
    %489 = arith.addf %484, %488 : vector<16x16xf32>
    %490 = vector.extract_strided_slice %460 {offsets = [0, 6], sizes = [16, 16], strides = [1, 1]} : vector<16x22xf32> to vector<16x16xf32>
    %c90 = arith.constant 90 : index
    %491 = memref.load %arg2[%c90] : memref<98xf32, #tpu.memory_space<smem>>
    %492 = vector.broadcast %491 : f32 to vector<16x16xf32>
    %493 = arith.mulf %490, %492 : vector<16x16xf32>
    %494 = arith.addf %489, %493 : vector<16x16xf32>
    %c1_66 = arith.constant 1 : index
    %c6_67 = arith.constant 6 : index
    %c0_68 = arith.constant 0 : index
    %495 = vector.load %arg4[%c1_66, %c6_67, %c0_68] : memref<2x22x22xf32, #tpu.memory_space<vmem>>, vector<1x16x22xf32>
    %496 = vector.shape_cast %495 : vector<1x16x22xf32> to vector<16x22xf32>
    %497 = vector.extract_strided_slice %496 {offsets = [0, 0], sizes = [16, 16], strides = [1, 1]} : vector<16x22xf32> to vector<16x16xf32>
    %c91 = arith.constant 91 : index
    %498 = memref.load %arg2[%c91] : memref<98xf32, #tpu.memory_space<smem>>
    %499 = vector.broadcast %498 : f32 to vector<16x16xf32>
    %500 = arith.mulf %497, %499 : vector<16x16xf32>
    %501 = vector.extract_strided_slice %496 {offsets = [0, 1], sizes = [16, 16], strides = [1, 1]} : vector<16x22xf32> to vector<16x16xf32>
    %c92 = arith.constant 92 : index
    %502 = memref.load %arg2[%c92] : memref<98xf32, #tpu.memory_space<smem>>
    %503 = vector.broadcast %502 : f32 to vector<16x16xf32>
    %504 = arith.mulf %501, %503 : vector<16x16xf32>
    %505 = arith.addf %500, %504 : vector<16x16xf32>
    %506 = vector.extract_strided_slice %496 {offsets = [0, 2], sizes = [16, 16], strides = [1, 1]} : vector<16x22xf32> to vector<16x16xf32>
    %c93 = arith.constant 93 : index
    %507 = memref.load %arg2[%c93] : memref<98xf32, #tpu.memory_space<smem>>
    %508 = vector.broadcast %507 : f32 to vector<16x16xf32>
    %509 = arith.mulf %506, %508 : vector<16x16xf32>
    %510 = arith.addf %505, %509 : vector<16x16xf32>
    %511 = vector.extract_strided_slice %496 {offsets = [0, 3], sizes = [16, 16], strides = [1, 1]} : vector<16x22xf32> to vector<16x16xf32>
    %c94 = arith.constant 94 : index
    %512 = memref.load %arg2[%c94] : memref<98xf32, #tpu.memory_space<smem>>
    %513 = vector.broadcast %512 : f32 to vector<16x16xf32>
    %514 = arith.mulf %511, %513 : vector<16x16xf32>
    %515 = arith.addf %510, %514 : vector<16x16xf32>
    %516 = vector.extract_strided_slice %496 {offsets = [0, 4], sizes = [16, 16], strides = [1, 1]} : vector<16x22xf32> to vector<16x16xf32>
    %c95 = arith.constant 95 : index
    %517 = memref.load %arg2[%c95] : memref<98xf32, #tpu.memory_space<smem>>
    %518 = vector.broadcast %517 : f32 to vector<16x16xf32>
    %519 = arith.mulf %516, %518 : vector<16x16xf32>
    %520 = arith.addf %515, %519 : vector<16x16xf32>
    %521 = vector.extract_strided_slice %496 {offsets = [0, 5], sizes = [16, 16], strides = [1, 1]} : vector<16x22xf32> to vector<16x16xf32>
    %c96 = arith.constant 96 : index
    %522 = memref.load %arg2[%c96] : memref<98xf32, #tpu.memory_space<smem>>
    %523 = vector.broadcast %522 : f32 to vector<16x16xf32>
    %524 = arith.mulf %521, %523 : vector<16x16xf32>
    %525 = arith.addf %520, %524 : vector<16x16xf32>
    %526 = vector.extract_strided_slice %496 {offsets = [0, 6], sizes = [16, 16], strides = [1, 1]} : vector<16x22xf32> to vector<16x16xf32>
    %c97 = arith.constant 97 : index
    %527 = memref.load %arg2[%c97] : memref<98xf32, #tpu.memory_space<smem>>
    %528 = vector.broadcast %527 : f32 to vector<16x16xf32>
    %529 = arith.mulf %526, %528 : vector<16x16xf32>
    %530 = arith.addf %525, %529 : vector<16x16xf32>
    %531 = arith.addf %62, %98 : vector<16x16xf32>
    %532 = arith.addf %134, %170 : vector<16x16xf32>
    %533 = arith.addf %206, %242 : vector<16x16xf32>
    %534 = arith.addf %278, %314 : vector<16x16xf32>
    %535 = arith.addf %350, %386 : vector<16x16xf32>
    %536 = arith.addf %422, %458 : vector<16x16xf32>
    %537 = arith.addf %494, %530 : vector<16x16xf32>
    %538 = arith.addf %531, %532 : vector<16x16xf32>
    %539 = arith.addf %533, %534 : vector<16x16xf32>
    %540 = arith.addf %535, %536 : vector<16x16xf32>
    %541 = arith.addf %538, %539 : vector<16x16xf32>
    %542 = arith.addf %540, %537 : vector<16x16xf32>
    %543 = arith.addf %541, %542 : vector<16x16xf32>
    %544 = arith.negf %543 : vector<16x16xf32>
    %545 = math.exp %544 : vector<16x16xf32>
    %cst_69 = arith.constant 1.000000e+00 : f32
    %546 = vector.broadcast %cst_69 : f32 to vector<16x16xf32>
    %547 = arith.addf %546, %545 : vector<16x16xf32>
    %548 = arith.divf %546, %547 : vector<16x16xf32>
    %c0_70 = arith.constant 0 : index
    %c0_71 = arith.constant 0 : index
    %c0_72 = arith.constant 0 : index
    %c0_73 = arith.constant 0 : index
    %549 = vector.load %arg3[%c0_70, %c0_71, %c0_72, %c0_73] : memref<1x1x16x16xf32, #tpu.memory_space<vmem>>, vector<1x1x16x16xf32>
    %550 = vector.shape_cast %549 : vector<1x1x16x16xf32> to vector<16x16xf32>
    %551 = vector.shape_cast %548 : vector<16x16xf32> to vector<1x1x16x16xf32>
    tpu.vector_store %arg3[%c0_70, %c0_71, %c0_72, %c0_73], %551 {strides = array<i32>} : memref<1x1x16x16xf32, #tpu.memory_space<vmem>>, vector<1x1x16x16xf32>,
    return
  }
  func.func @transform_0(%arg0: i32) -> (i32, i32, i32, i32) {
    %c0_i32 = arith.constant 0 : i32
    %c0_i32_0 = arith.constant 0 : i32
    %c0_i32_1 = arith.constant 0 : i32
    %c0_i32_2 = arith.constant 0 : i32
    return %arg0, %c0_i32, %c0_i32_0, %c0_i32_1 : i32, i32, i32, i32
  }
  func.func @transform_1(%arg0: i32) -> i32 {
    %c0_i32 = arith.constant 0 : i32
    %c0_i32_0 = arith.constant 0 : i32
    return %c0_i32 : i32
  }
  func.func @transform_2(%arg0: i32) -> (i32, i32, i32, i32) {
    %c0_i32 = arith.constant 0 : i32
    %c0_i32_0 = arith.constant 0 : i32
    %c0_i32_1 = arith.constant 0 : i32
    %c0_i32_2 = arith.constant 0 : i32
    return %arg0, %c0_i32, %c0_i32_0, %c0_i32_1 : i32, i32, i32, i32
  }
}

</mosaic_0001>

<llo_original>
// kernel: tpu_custom_call.1
$region0: #{tpu_custom_call.1}
  #allocation0 [shape = 'u32[]', space=smem, size = 0x4, offset = 0x4, fixed_abs, tag = 'smem constant byte address 0x4 - core index']
  #allocation1 [shape = 'u32[144,128]{1,0:T(1,128)}', space=vmem, size = 0x12000, scoped, tag = 'internal scratch']
  #allocation2 [shape = 'f32[2,22,22]{2,1,0:T(8,128)}', space=vmem, size = 0x6000, scoped, tag = 'scratch operand']
  %s0 = inlined_call_operand.hbm [shape: f32[2,4,16,16], index: 0, kind: input, shape index: {}]
  %s1 = inlined_call_operand.vmem [shape: f32[98], index: 1, kind: input, shape index: {}]
  %s2 = inlined_call_operand.hbm [shape: f32[2,1,16,16], index: 2, kind: output, shape index: {}]
  %s3 = sld [smem:[#allocation0]]
  $region49: #{tpu_custom_call.1} parent=0
    _
  %s5 = ssub.s32 1, %s3
  %s6 = scalar_select 0, %s5, %s3
  $region1: #{tpu_custom_call.1} parent=0
    #allocation3 [shape = 'u8[65536]{0}', space=vmem, size = 0x10000, scoped, tag = 'input window, operand 0']
    #allocation4 [shape = 's32[2]{0}', space=sflag, size = 0x8, scoped, tag = 'scoped memory for tpu_custom_call.1']
    #allocation5 [shape = 's32[2]{0}', space=sflag, size = 0x8, scoped, tag = 'scoped memory for tpu_custom_call.1']
    #allocation6 [shape = 's32[2]{0}', space=sflag, size = 0x8, scoped, tag = 'scoped memory for tpu_custom_call.1']
    #allocation7 [shape = 'u8[512]{0}', space=smem, size = 0x200, scoped, tag = 'input window, operand 1, single buffered']
    #allocation8 [shape = 'u8[16384]{0}', space=vmem, size = 0x4000, scoped, tag = 'output window, operand 0']
    %7 = vsyncpa [#allocation4], 0
    %s8 = scalar_lea.sflag [#allocation4], 1
    %9 = vsyncpa %s8, 0
    %10 = vsyncpa [#allocation6], 0
    %11 = vsyncpa [#allocation5], 0
    %s12 = scalar_lea.sflag [#allocation5], 1
    %13 = vsyncpa %s12, 0
    loop: start=0, step=1, limit=4
    $region2: #{tpu_custom_call.1} parent=1 // loop_pre_header
      _
    $region3: #{tpu_custom_call.1} parent=1 // loop_header
      %s15 = sphi 0, %s19
      %p16 = scmp.ge.s32.totalorder %s15, 4
      %s25 = sphi 0, %s27
      %s28 = sphi 0, %s25
      %s29 = sphi 0, %s28
      %s45 = sphi 0, %s29
      %s49 = sphi 0, %s49
      %s51 = sphi 0, %s49
      %s52 = sphi 0, %s51
      %s66 = sphi 0, %s52
      %s72 = sphi 0, %s74
      %s75 = sphi 0, %s72
      %s76 = sphi 0, %s75
      %s92 = sphi 0, %s76
    $region4: #{tpu_custom_call.1} parent=1 // loop_header_branch
      %18 = sbr.rel (%p16) target = $region8
    $region5: #{tpu_custom_call.1} parent=1 // loop_body
      %s20 = ssub.s32 %s15, 1
      %s21 = ssub.s32 %s15, 2
      %s22 = sadd.s32 %s15, 1
      %s23 = ssub.s32 %s15, %s22
      %p24 = scmp.eq.s32.totalorder %s23, 0
      %s26 = sadd.s32 %s25, 1
      %s27 = scalar_select %p24, %s25, %s26
      %p30 = pneg %p24
      %p31 = scmp.eq.s32.totalorder %s15, 1
      %p32 = por %p30, %p31
      %p33 = scmp.ne.s32.totalorder %s25, %s28
      %p34 = scmp.eq.s32.totalorder %s15, 0
      %p35 = por %p33, %p34
      %p36 = scmp.ne.s32.totalorder %s25, %s28
      %p37 = scmp.eq.s32.totalorder %s20, 1
      %p38 = por %p36, %p37
      %p39 = scmp.ne.s32.totalorder %s28, %s29
      %p40 = scmp.eq.s32.totalorder %s20, 0
      %p41 = por %p39, %p40
      %p42 = scmp.ne.s32.totalorder %s28, %s29
      %p43 = scmp.eq.s32.totalorder %s21, 1
      %p44 = por %p42, %p43
      %p46 = scmp.ne.s32.totalorder %s29, %s45
      %p47 = scmp.eq.s32.totalorder %s21, 0
      %p48 = por %p46, %p47
      %s50 = sadd.s32 %s49, 1
      %p53 = scmp.eq.s32.totalorder %s15, 1
      %p54 = scmp.ne.s32.totalorder %s49, %s51
      %p55 = scmp.eq.s32.totalorder %s15, 0
      %p56 = por %p54, %p55
      %p57 = scmp.ne.s32.totalorder %s49, %s51
      %p58 = scmp.eq.s32.totalorder %s20, 1
      %p59 = por %p57, %p58
      %p60 = scmp.ne.s32.totalorder %s51, %s52
      %p61 = scmp.eq.s32.totalorder %s20, 0
      %p62 = por %p60, %p61
      %p63 = scmp.ne.s32.totalorder %s51, %s52
      %p64 = scmp.eq.s32.totalorder %s21, 1
      %p65 = por %p63, %p64
      %p67 = scmp.ne.s32.totalorder %s52, %s66
      %p68 = scmp.eq.s32.totalorder %s21, 0
      %p69 = por %p67, %p68
      %s70 = ssub.s32 %s15, %s22
      %p71 = scmp.eq.s32.totalorder %s70, 0
      %s73 = sadd.s32 %s72, 1
      %s74 = scalar_select %p71, %s72, %s73
      %p77 = pneg %p71
      %p78 = scmp.eq.s32.totalorder %s15, 1
      %p79 = por %p77, %p78
      %p80 = scmp.ne.s32.totalorder %s72, %s75
      %p81 = scmp.eq.s32.totalorder %s15, 0
      %p82 = por %p80, %p81
      %p83 = scmp.ne.s32.totalorder %s72, %s75
      %p84 = scmp.eq.s32.totalorder %s20, 1
      %p85 = por %p83, %p84
      %p86 = scmp.ne.s32.totalorder %s75, %s76
      %p87 = scmp.eq.s32.totalorder %s20, 0
      %p88 = por %p86, %p87
      %p89 = scmp.ne.s32.totalorder %s75, %s76
      %p90 = scmp.eq.s32.totalorder %s21, 1
      %p91 = por %p89, %p90
      %p93 = scmp.ne.s32.totalorder %s76, %s92
      %p94 = scmp.eq.s32.totalorder %s21, 0
      %p95 = por %p93, %p94
      %p96 = scmp.le.s32.totalorder 1, %s15
      %p97 = scmp.lt.s32.totalorder %s15, 3
      %p98 = pnand %p96, %p97
      %p99 = pneg %p98
      // Predicated region
      $region9: #{tpu_custom_call.1} parent=5 // pred_check
        _
      $region10: #{tpu_custom_call.1} parent=5 // pred_check_branch
        %101 = sbr.rel (%p98) target = $region12
      $region11: #{tpu_custom_call.1} parent=5 // pred_region
        %s102 = ssub.s32 %s15, 1
        // Predicated region
        $region13: #{tpu_custom_call.1} parent=11 // pred_check
          %p103 = pneg %p62
        $region14: #{tpu_custom_call.1} parent=11 // pred_check_branch
          %105 = sbr.rel (%p103) target = $region16
        $region15: #{tpu_custom_call.1} parent=11 // pred_region
          %s107 = ssub.s32 16, 16
          %108 = vsyncadd [#allocation6], %s107
          %s110 = sshll.u32 %s1, 4
          %s111 = int_to_ptr.vmem [resolvable:$true] %s110
          %113 = dma.vmem_to_smem %s111, 16, [#allocation7], [#allocation6]
        $region16: #{tpu_custom_call.1} parent=11 // pred_fallthru
          _
      $region12: #{tpu_custom_call.1} parent=5 // pred_fallthru
        _
      %p114 = scmp.lt.s32.totalorder %s15, 2
      // Predicated region
      $region17: #{tpu_custom_call.1} parent=5 // pred_check
        %p115 = pneg %p114
      $region18: #{tpu_custom_call.1} parent=5 // pred_check_branch
        %117 = sbr.rel (%p115) target = $region20
      $region19: #{tpu_custom_call.1} parent=5 // pred_region
        // Predicated region
        $region21: #{tpu_custom_call.1} parent=19 // pred_check
          %p118 = pneg %p35
        $region22: #{tpu_custom_call.1} parent=19 // pred_check_branch
          %120 = sbr.rel (%p118) target = $region24
        $region23: #{tpu_custom_call.1} parent=19 // pred_region
          %s121 = sand.u32 %s25, 1
          %s122 = scalar_lea.sflag [#allocation4], %s121
          %s123 = sand.u32 %s25, 1
          %s124 = smul.addr %s123, 64
          %s125 = scalar_lea.vmem [#allocation3], %s124
          %s127 = ssub.s32 1024, 1024
          %128 = vsyncadd %s122, %s127
          %s129 = smul.addr %s15, 8
          %s130 = smul.addr %s129, 128
          %s131 = scalar_lea.hbm %s0, %s130
          %s132 = sshll.u32 %s125, 4
          %s133 = int_to_ptr.vmem [resolvable:$true] %s132
          %138 = dma.hbm_to_vmem [thread:$0]  %s131, 1024, %s133, %s122, 128, 128, 8
        $region24: #{tpu_custom_call.1} parent=19 // pred_fallthru
          _
      $region20: #{tpu_custom_call.1} parent=5 // pred_fallthru
        _
      %p139 = scmp.le.s32.totalorder 1, %s15
      %p140 = scmp.lt.s32.totalorder %s15, 3
      %p141 = pnand %p139, %p140
      %p142 = pneg %p141
      // Predicated region
      $region25: #{tpu_custom_call.1} parent=5 // pred_check
        _
      $region26: #{tpu_custom_call.1} parent=5 // pred_check_branch
        %144 = sbr.rel (%p141) target = $region28
      $region27: #{tpu_custom_call.1} parent=5 // pred_region
        %s145 = ssub.s32 %s15, 1
        %s146 = sand.u32 %s28, 1
        %s147 = scalar_lea.sflag [#allocation4], %s146
        %s148 = sand.u32 %s28, 1
        %s149 = smul.addr %s148, 64
        %s150 = scalar_lea.vmem [#allocation3], %s149
        // Predicated region
        $region29: #{tpu_custom_call.1} parent=27 // pred_check
          %p151 = pneg %p41
        $region30: #{tpu_custom_call.1} parent=27 // pred_check_branch
          %153 = sbr.rel (%p151) target = $region32
        $region31: #{tpu_custom_call.1} parent=27 // pred_region
          %154 = dma.done %s147, 1024
        $region32: #{tpu_custom_call.1} parent=27 // pred_fallthru
          _
        // Predicated region
        $region33: #{tpu_custom_call.1} parent=27 // pred_check
          %p155 = pneg %p62
        $region34: #{tpu_custom_call.1} parent=27 // pred_check_branch
          %157 = sbr.rel (%p155) target = $region36
        $region35: #{tpu_custom_call.1} parent=27 // pred_region
          %158 = dma.done [#allocation6], 16
        $region36: #{tpu_custom_call.1} parent=27 // pred_fallthru
          _
        %159 = sfence
        %s160 = sand.u32 %s28, 1
        %s161 = scalar_lea.sflag [#allocation4], %s160
        %s162 = sand.u32 %s28, 1
        %s163 = smul.addr %s162, 64
        %s164 = scalar_lea.vmem [#allocation3], %s163
        %p165 = pneg %p41
        %p166 = pneg %p38
        %p167 = pneg %p62
        %p168 = pneg %p59
        %p169 = pneg %p88
        %p170 = pneg %p85
        %s171 = sand.u32 %s75, 1
        %s172 = scalar_lea.sflag [#allocation5], %s171
        %s173 = sand.u32 %s75, 1
        %s174 = smul.addr %s173, 16
        %s175 = scalar_lea.vmem [#allocation8], %s174
        %v176 = vld [vmem:[%s150] sm:$0xff]
        %v177 = vld [vmem:[%s150 + $0x8] sm:$0xff]
        %s178 = scalar_lea.vmem %s150, 16 [#allocation3]
        %v179 = vld [vmem:[%s178] sm:$0xff]
        %v180 = vld [vmem:[%s178 + $0x8] sm:$0xff]
        %v181 = vadd.f32 %v176, %v179
        %v182 = vadd.f32 %v177, %v180
        %v183 = vmax.f32 %v176, %v179
        %v184 = vmax.f32 %v177, %v180
        %s185 = scalar_lea.vmem %s150, 32 [#allocation3]
        %v186 = vld [vmem:[%s185] sm:$0xff]
        %v187 = vld [vmem:[%s185 + $0x8] sm:$0xff]
        %v188 = vadd.f32 %v181, %v186
        %v189 = vadd.f32 %v182, %v187
        %v190 = vmax.f32 %v183, %v186
        %v191 = vmax.f32 %v184, %v187
        %s192 = scalar_lea.vmem %s150, 48 [#allocation3]
        %v193 = vld [vmem:[%s192] sm:$0xff]
        %v194 = vld [vmem:[%s192 + $0x8] sm:$0xff]
        %v195 = vadd.f32 %v188, %v193
        %v196 = vadd.f32 %v189, %v194
        %v197 = vmax.f32 %v190, %v193
        %v198 = vmax.f32 %v191, %v194
        %v199 = vmul.f32 %v195, 0.25
        %v200 = vmul.f32 %v196, 0.25
        %vm201 = vcmask 179200
        %202 = vst.msk [vmem:[#allocation2] sm:$0xff] %vm201, 0.0
        %203 = vst.msk [vmem:[#allocation2 + $0x8] sm:$0xff] %vm201, 0.0
        %vm204 = vcmask 177152
        %205 = vst.msk [vmem:[#allocation2 + $0x10] sm:$0x3f] %vm204, 0.0
        %206 = vst.msk [vmem:[#allocation2 + $0x18] sm:$0xff] %vm201, 0.0
        %207 = vst.msk [vmem:[#allocation2 + $0x20] sm:$0xff] %vm201, 0.0
        %208 = vst.msk [vmem:[#allocation2 + $0x28] sm:$0x3f] %vm204, 0.0
        %211 = vrot.lane.b32.xlu0 %v199, 3
        %v212 = vpop.permute.xlu0 %211
        %213 = vrot.lane.b32.xlu0 %v200, 3
        %v214 = vpop.permute.xlu0 %213
        %vm217 = vcmask 23552
        %v218 = vsel %vm217, 0.0, %v212
        %v219 = vsel %vm217, 0.0, %v214
        %vm220 = vcmask 154624
        %v221 = vsel %vm220, %v218, 0.0
        %v222 = vsel %vm220, %v219, 0.0
        %223 = vst.msk [vmem:[#allocation2 + $0x3] sm:$0xff] %vm201, %v221
        %224 = vst.msk [vmem:[#allocation2 + $0xb] sm:$0xff] %vm201, %v222
        %227 = vrot.lane.b32.xlu0 %v197, 3
        %v228 = vpop.permute.xlu0 %227
        %229 = vrot.lane.b32.xlu0 %v198, 3
        %v230 = vpop.permute.xlu0 %229
        %v233 = vsel %vm217, 0.0, %v228
        %v234 = vsel %vm217, 0.0, %v230
        %v235 = vsel %vm220, %v233, 0.0
        %v236 = vsel %vm220, %v234, 0.0
        %s237 = scalar_lea.vmem [#allocation2], 24
        %238 = vst.msk [vmem:[%s237 + $0x3] sm:$0xff] %vm201, %v235
        %239 = vst.msk [vmem:[%s237 + $0xb] sm:$0xff] %vm201, %v236
        %v240 = vld [vmem:[#allocation2] sm:$0xff]
        %v241 = vld [vmem:[#allocation2 + $0x8] sm:$0xff]
        %s242 = sld [smem:[#allocation7]]
        %v243 = vstv %s242
        %v244 = vmul.f32 %v240, %v243
        %v245 = vmul.f32 %v241, %v243
        %s246 = sld [smem:[#allocation7 + $0x1]]
        %v247 = vstv %s246
        %v248 = vmul.f32 %v240, %v247
        %v249 = vmul.f32 %v241, %v247
        %252 = vrot.lane.b32.xlu0 %v248, 127
        %v253 = vpop.permute.xlu0 %252
        %254 = vrot.lane.b32.xlu0 %v249, 127
        %v255 = vpop.permute.xlu0 %254
        %v258 = vadd.f32 %v244, %v253
        %v259 = vadd.f32 %v245, %v255
        %s260 = sld [smem:[#allocation7 + $0x2]]
        %v261 = vstv %s260
        %v262 = vmul.f32 %v240, %v261
        %v263 = vmul.f32 %v241, %v261
        %266 = vrot.lane.b32.xlu0 %v262, 126
        %v267 = vpop.permute.xlu0 %266
        %268 = vrot.lane.b32.xlu0 %v263, 126
        %v269 = vpop.permute.xlu0 %268
        %v272 = vadd.f32 %v258, %v267
        %v273 = vadd.f32 %v259, %v269
        %s274 = sld [smem:[#allocation7 + $0x3]]
        %v275 = vstv %s274
        %v276 = vmul.f32 %v240, %v275
        %v277 = vmul.f32 %v241, %v275
        %280 = vrot.lane.b32.xlu0 %v276, 125
        %v281 = vpop.permute.xlu0 %280
        %282 = vrot.lane.b32.xlu0 %v277, 125
        %v283 = vpop.permute.xlu0 %282
        %v286 = vadd.f32 %v272, %v281
        %v287 = vadd.f32 %v273, %v283
        %s288 = sld [smem:[#allocation7 + $0x4]]
        %v289 = vstv %s288
        %v290 = vmul.f32 %v240, %v289
        %v291 = vmul.f32 %v241, %v289
        %294 = vrot.lane.b32.xlu0 %v290, 124
        %v295 = vpop.permute.xlu0 %294
        %296 = vrot.lane.b32.xlu0 %v291, 124
        %v297 = vpop.permute.xlu0 %296
        %v300 = vadd.f32 %v286, %v295
        %v301 = vadd.f32 %v287, %v297
        %s302 = sld [smem:[#allocation7 + $0x5]]
        %v303 = vstv %s302
        %v304 = vmul.f32 %v240, %v303
        %v305 = vmul.f32 %v241, %v303
        %308 = vrot.lane.b32.xlu0 %v304, 123
        %v309 = vpop.permute.xlu0 %308
        %310 = vrot.lane.b32.xlu0 %v305, 123
        %v311 = vpop.permute.xlu0 %310
        %v314 = vadd.f32 %v300, %v309
        %v315 = vadd.f32 %v301, %v311
        %s316 = sld [smem:[#allocation7 + $0x6]]
        %v317 = vstv %s316
        %v318 = vmul.f32 %v240, %v317
        %v319 = vmul.f32 %v241, %v317
        %322 = vrot.lane.b32.xlu0 %v318, 122
        %v323 = vpop.permute.xlu0 %322
        %324 = vrot.lane.b32.xlu0 %v319, 122
        %v325 = vpop.permute.xlu0 %324
        %v328 = vadd.f32 %v314, %v323
        %v329 = vadd.f32 %v315, %v325
        %v330 = vld [vmem:[#allocation2 + $0x1] sm:$0xff]
        %v331 = vld [vmem:[#allocation2 + $0x9] sm:$0xff]
        %s332 = sld [smem:[#allocation7 + $0x7]]
        %v333 = vstv %s332
        %v334 = vmul.f32 %v330, %v333
        %v335 = vmul.f32 %v331, %v333
        %s336 = sld [smem:[#allocation7 + $0x8]]
        %v337 = vstv %s336
        %v338 = vmul.f32 %v330, %v337
        %v339 = vmul.f32 %v331, %v337
        %342 = vrot.lane.b32.xlu0 %v338, 127
        %v343 = vpop.permute.xlu0 %342
        %344 = vrot.lane.b32.xlu0 %v339, 127
        %v345 = vpop.permute.xlu0 %344
        %v348 = vadd.f32 %v334, %v343
        %v349 = vadd.f32 %v335, %v345
        %s350 = sld [smem:[#allocation7 + $0x9]]
        %v351 = vstv %s350
        %v352 = vmul.f32 %v330, %v351
        %v353 = vmul.f32 %v331, %v351
        %356 = vrot.lane.b32.xlu0 %v352, 126
        %v357 = vpop.permute.xlu0 %356
        %358 = vrot.lane.b32.xlu0 %v353, 126
        %v359 = vpop.permute.xlu0 %358
        %v362 = vadd.f32 %v348, %v357
        %v363 = vadd.f32 %v349, %v359
        %s364 = sld [smem:[#allocation7 + $0xa]]
        %v365 = vstv %s364
        %v366 = vmul.f32 %v330, %v365
        %v367 = vmul.f32 %v331, %v365
        %370 = vrot.lane.b32.xlu0 %v366, 125
        %v371 = vpop.permute.xlu0 %370
        %372 = vrot.lane.b32.xlu0 %v367, 125
        %v373 = vpop.permute.xlu0 %372
        %v376 = vadd.f32 %v362, %v371
        %v377 = vadd.f32 %v363, %v373
        %s378 = sld [smem:[#allocation7 + $0xb]]
        %v379 = vstv %s378
        %v380 = vmul.f32 %v330, %v379
        %v381 = vmul.f32 %v331, %v379
        %384 = vrot.lane.b32.xlu0 %v380, 124
        %v385 = vpop.permute.xlu0 %384
        %386 = vrot.lane.b32.xlu0 %v381, 124
        %v387 = vpop.permute.xlu0 %386
        %v390 = vadd.f32 %v376, %v385
        %v391 = vadd.f32 %v377, %v387
        %s392 = sld [smem:[#allocation7 + $0xc]]
        %v393 = vstv %s392
        %v394 = vmul.f32 %v330, %v393
        %v395 = vmul.f32 %v331, %v393
        %398 = vrot.lane.b32.xlu0 %v394, 123
        %v399 = vpop.permute.xlu0 %398
        %400 = vrot.lane.b32.xlu0 %v395, 123
        %v401 = vpop.permute.xlu0 %400
        %v404 = vadd.f32 %v390, %v399
        %v405 = vadd.f32 %v391, %v401
        %s406 = sld [smem:[#allocation7 + $0xd]]
        %v407 = vstv %s406
        %v408 = vmul.f32 %v330, %v407
        %v409 = vmul.f32 %v331, %v407
        %412 = vrot.lane.b32.xlu0 %v408, 122
        %v413 = vpop.permute.xlu0 %412
        %414 = vrot.lane.b32.xlu0 %v409, 122
        %v415 = vpop.permute.xlu0 %414
        %v418 = vadd.f32 %v404, %v413
        %v419 = vadd.f32 %v405, %v415
        %v420 = vld [vmem:[#allocation2 + $0x2] sm:$0xff]
        %v421 = vld [vmem:[#allocation2 + $0xa] sm:$0xff]
        %s422 = sld [smem:[#allocation7 + $0xe]]
        %v423 = vstv %s422
        %v424 = vmul.f32 %v420, %v423
        %v425 = vmul.f32 %v421, %v423
        %s426 = sld [smem:[#allocation7 + $0xf]]
        %v427 = vstv %s426
        %v428 = vmul.f32 %v420, %v427
        %v429 = vmul.f32 %v421, %v427
        %432 = vrot.lane.b32.xlu0 %v428, 127
        %v433 = vpop.permute.xlu0 %432
        %434 = vrot.lane.b32.xlu0 %v429, 127
        %v435 = vpop.permute.xlu0 %434
        %v438 = vadd.f32 %v424, %v433
        %v439 = vadd.f32 %v425, %v435
        %s440 = sld [smem:[#allocation7 + $0x10]]
        %v441 = vstv %s440
        %v442 = vmul.f32 %v420, %v441
        %v443 = vmul.f32 %v421, %v441
        %446 = vrot.lane.b32.xlu0 %v442, 126
        %v447 = vpop.permute.xlu0 %446
        %448 = vrot.lane.b32.xlu0 %v443, 126
        %v449 = vpop.permute.xlu0 %448
        %v452 = vadd.f32 %v438, %v447
        %v453 = vadd.f32 %v439, %v449
        %s454 = sld [smem:[#allocation7 + $0x11]]
        %v455 = vstv %s454
        %v456 = vmul.f32 %v420, %v455
        %v457 = vmul.f32 %v421, %v455
        %460 = vrot.lane.b32.xlu0 %v456, 125
        %v461 = vpop.permute.xlu0 %460
        %462 = vrot.lane.b32.xlu0 %v457, 125
        %v463 = vpop.permute.xlu0 %462
        %v466 = vadd.f32 %v452, %v461
        %v467 = vadd.f32 %v453, %v463
        %s468 = sld [smem:[#allocation7 + $0x12]]
        %v469 = vstv %s468
        %v470 = vmul.f32 %v420, %v469
        %v471 = vmul.f32 %v421, %v469
        %474 = vrot.lane.b32.xlu0 %v470, 124
        %v475 = vpop.permute.xlu0 %474
        %476 = vrot.lane.b32.xlu0 %v471, 124
        %v477 = vpop.permute.xlu0 %476
        %v480 = vadd.f32 %v466, %v475
        %v481 = vadd.f32 %v467, %v477
        %s482 = sld [smem:[#allocation7 + $0x13]]
        %v483 = vstv %s482
        %v484 = vmul.f32 %v420, %v483
        %v485 = vmul.f32 %v421, %v483
        %488 = vrot.lane.b32.xlu0 %v484, 123
        %v489 = vpop.permute.xlu0 %488
        %490 = vrot.lane.b32.xlu0 %v485, 123
        %v491 = vpop.permute.xlu0 %490
        %v494 = vadd.f32 %v480, %v489
        %v495 = vadd.f32 %v481, %v491
        %s496 = sld [smem:[#allocation7 + $0x14]]
        %v497 = vstv %s496
        %v498 = vmul.f32 %v420, %v497
        %v499 = vmul.f32 %v421, %v497
        %502 = vrot.lane.b32.xlu0 %v498, 122
        %v503 = vpop.permute.xlu0 %502
        %504 = vrot.lane.b32.xlu0 %v499, 122
        %v505 = vpop.permute.xlu0 %504
        %v508 = vadd.f32 %v494, %v503
        %v509 = vadd.f32 %v495, %v505
        %v510 = vld [vmem:[#allocation2 + $0x3] sm:$0xff]
        %v511 = vld [vmem:[#allocation2 + $0xb] sm:$0xff]
        %s512 = sld [smem:[#allocation7 + $0x15]]
        %v513 = vstv %s512
        %v514 = vmul.f32 %v510, %v513
        %v515 = vmul.f32 %v511, %v513
        %s516 = sld [smem:[#allocation7 + $0x16]]
        %v517 = vstv %s516
        %v518 = vmul.f32 %v510, %v517
        %v519 = vmul.f32 %v511, %v517
        %522 = vrot.lane.b32.xlu0 %v518, 127
        %v523 = vpop.permute.xlu0 %522
        %524 = vrot.lane.b32.xlu0 %v519, 127
        %v525 = vpop.permute.xlu0 %524
        %v528 = vadd.f32 %v514, %v523
        %v529 = vadd.f32 %v515, %v525
        %s530 = sld [smem:[#allocation7 + $0x17]]
        %v531 = vstv %s530
        %v532 = vmul.f32 %v510, %v531
        %v533 = vmul.f32 %v511, %v531
        %536 = vrot.lane.b32.xlu0 %v532, 126
        %v537 = vpop.permute.xlu0 %536
        %538 = vrot.lane.b32.xlu0 %v533, 126
        %v539 = vpop.permute.xlu0 %538
        %v542 = vadd.f32 %v528, %v537
        %v543 = vadd.f32 %v529, %v539
        %s544 = sld [smem:[#allocation7 + $0x18]]
        %v545 = vstv %s544
        %v546 = vmul.f32 %v510, %v545
        %v547 = vmul.f32 %v511, %v545
        %550 = vrot.lane.b32.xlu0 %v546, 125
        %v551 = vpop.permute.xlu0 %550
        %552 = vrot.lane.b32.xlu0 %v547, 125
        %v553 = vpop.permute.xlu0 %552
        %v556 = vadd.f32 %v542, %v551
        %v557 = vadd.f32 %v543, %v553
        %s558 = sld [smem:[#allocation7 + $0x19]]
        %v559 = vstv %s558
        %v560 = vmul.f32 %v510, %v559
        %v561 = vmul.f32 %v511, %v559
        %564 = vrot.lane.b32.xlu0 %v560, 124
        %v565 = vpop.permute.xlu0 %564
        %566 = vrot.lane.b32.xlu0 %v561, 124
        %v567 = vpop.permute.xlu0 %566
        %v570 = vadd.f32 %v556, %v565
        %v571 = vadd.f32 %v557, %v567
        %s572 = sld [smem:[#allocation7 + $0x1a]]
        %v573 = vstv %s572
        %v574 = vmul.f32 %v510, %v573
        %v575 = vmul.f32 %v511, %v573
        %578 = vrot.lane.b32.xlu0 %v574, 123
        %v579 = vpop.permute.xlu0 %578
        %580 = vrot.lane.b32.xlu0 %v575, 123
        %v581 = vpop.permute.xlu0 %580
        %v584 = vadd.f32 %v570, %v579
        %v585 = vadd.f32 %v571, %v581
        %s586 = sld [smem:[#allocation7 + $0x1b]]
        %v587 = vstv %s586
        %v588 = vmul.f32 %v510, %v587
        %v589 = vmul.f32 %v511, %v587
        %592 = vrot.lane.b32.xlu0 %v588, 122
        %v593 = vpop.permute.xlu0 %592
        %594 = vrot.lane.b32.xlu0 %v589, 122
        %v595 = vpop.permute.xlu0 %594
        %v598 = vadd.f32 %v584, %v593
        %v599 = vadd.f32 %v585, %v595
        %v600 = vld [vmem:[#allocation2 + $0x4] sm:$0xff]
        %v601 = vld [vmem:[#allocation2 + $0xc] sm:$0xff]
        %s602 = sld [smem:[#allocation7 + $0x1c]]
        %v603 = vstv %s602
        %v604 = vmul.f32 %v600, %v603
        %v605 = vmul.f32 %v601, %v603
        %s606 = sld [smem:[#allocation7 + $0x1d]]
        %v607 = vstv %s606
        %v608 = vmul.f32 %v600, %v607
        %v609 = vmul.f32 %v601, %v607
        %612 = vrot.lane.b32.xlu0 %v608, 127
        %v613 = vpop.permute.xlu0 %612
        %614 = vrot.lane.b32.xlu0 %v609, 127
        %v615 = vpop.permute.xlu0 %614
        %v618 = vadd.f32 %v604, %v613
        %v619 = vadd.f32 %v605, %v615
        %s620 = sld [smem:[#allocation7 + $0x1e]]
        %v621 = vstv %s620
        %v622 = vmul.f32 %v600, %v621
        %v623 = vmul.f32 %v601, %v621
        %626 = vrot.lane.b32.xlu0 %v622, 126
        %v627 = vpop.permute.xlu0 %626
        %628 = vrot.lane.b32.xlu0 %v623, 126
        %v629 = vpop.permute.xlu0 %628
        %v632 = vadd.f32 %v618, %v627
        %v633 = vadd.f32 %v619, %v629
        %s634 = sld [smem:[#allocation7 + $0x1f]]
        %v635 = vstv %s634
        %v636 = vmul.f32 %v600, %v635
        %v637 = vmul.f32 %v601, %v635
        %640 = vrot.lane.b32.xlu0 %v636, 125
        %v641 = vpop.permute.xlu0 %640
        %642 = vrot.lane.b32.xlu0 %v637, 125
        %v643 = vpop.permute.xlu0 %642
        %v646 = vadd.f32 %v632, %v641
        %v647 = vadd.f32 %v633, %v643
        %s648 = sld [smem:[#allocation7 + $0x20]]
        %v649 = vstv %s648
        %v650 = vmul.f32 %v600, %v649
        %v651 = vmul.f32 %v601, %v649
        %654 = vrot.lane.b32.xlu0 %v650, 124
        %v655 = vpop.permute.xlu0 %654
        %656 = vrot.lane.b32.xlu0 %v651, 124
        %v657 = vpop.permute.xlu0 %656
        %v660 = vadd.f32 %v646, %v655
        %v661 = vadd.f32 %v647, %v657
        %s662 = sld [smem:[#allocation7 + $0x21]]
        %v663 = vstv %s662
        %v664 = vmul.f32 %v600, %v663
        %v665 = vmul.f32 %v601, %v663
        %668 = vrot.lane.b32.xlu0 %v664, 123
        %v669 = vpop.permute.xlu0 %668
        %670 = vrot.lane.b32.xlu0 %v665, 123
        %v671 = vpop.permute.xlu0 %670
        %v674 = vadd.f32 %v660, %v669
        %v675 = vadd.f32 %v661, %v671
        %s676 = sld [smem:[#allocation7 + $0x22]]
        %v677 = vstv %s676
        %v678 = vmul.f32 %v600, %v677
        %v679 = vmul.f32 %v601, %v677
        %682 = vrot.lane.b32.xlu0 %v678, 122
        %v683 = vpop.permute.xlu0 %682
        %684 = vrot.lane.b32.xlu0 %v679, 122
        %v685 = vpop.permute.xlu0 %684
        %v688 = vadd.f32 %v674, %v683
        %v689 = vadd.f32 %v675, %v685
        %v690 = vld [vmem:[#allocation2 + $0x5] sm:$0xff]
        %v691 = vld [vmem:[#allocation2 + $0xd] sm:$0xff]
        %s692 = sld [smem:[#allocation7 + $0x23]]
        %v693 = vstv %s692
        %v694 = vmul.f32 %v690, %v693
        %v695 = vmul.f32 %v691, %v693
        %s696 = sld [smem:[#allocation7 + $0x24]]
        %v697 = vstv %s696
        %v698 = vmul.f32 %v690, %v697
        %v699 = vmul.f32 %v691, %v697
        %702 = vrot.lane.b32.xlu0 %v698, 127
        %v703 = vpop.permute.xlu0 %702
        %704 = vrot.lane.b32.xlu0 %v699, 127
        %v705 = vpop.permute.xlu0 %704
        %v708 = vadd.f32 %v694, %v703
        %v709 = vadd.f32 %v695, %v705
        %s710 = sld [smem:[#allocation7 + $0x25]]
        %v711 = vstv %s710
        %v712 = vmul.f32 %v690, %v711
        %v713 = vmul.f32 %v691, %v711
        %716 = vrot.lane.b32.xlu0 %v712, 126
        %v717 = vpop.permute.xlu0 %716
        %718 = vrot.lane.b32.xlu0 %v713, 126
        %v719 = vpop.permute.xlu0 %718
        %v722 = vadd.f32 %v708, %v717
        %v723 = vadd.f32 %v709, %v719
        %s724 = sld [smem:[#allocation7 + $0x26]]
        %v725 = vstv %s724
        %v726 = vmul.f32 %v690, %v725
        %v727 = vmul.f32 %v691, %v725
        %730 = vrot.lane.b32.xlu0 %v726, 125
        %v731 = vpop.permute.xlu0 %730
        %732 = vrot.lane.b32.xlu0 %v727, 125
        %v733 = vpop.permute.xlu0 %732
        %v736 = vadd.f32 %v722, %v731
        %v737 = vadd.f32 %v723, %v733
        %s738 = sld [smem:[#allocation7 + $0x27]]
        %v739 = vstv %s738
        %v740 = vmul.f32 %v690, %v739
        %v741 = vmul.f32 %v691, %v739
        %744 = vrot.lane.b32.xlu0 %v740, 124
        %v745 = vpop.permute.xlu0 %744
        %746 = vrot.lane.b32.xlu0 %v741, 124
        %v747 = vpop.permute.xlu0 %746
        %v750 = vadd.f32 %v736, %v745
        %v751 = vadd.f32 %v737, %v747
        %s752 = sld [smem:[#allocation7 + $0x28]]
        %v753 = vstv %s752
        %v754 = vmul.f32 %v690, %v753
        %v755 = vmul.f32 %v691, %v753
        %758 = vrot.lane.b32.xlu0 %v754, 123
        %v759 = vpop.permute.xlu0 %758
        %760 = vrot.lane.b32.xlu0 %v755, 123
        %v761 = vpop.permute.xlu0 %760
        %v764 = vadd.f32 %v750, %v759
        %v765 = vadd.f32 %v751, %v761
        %s766 = sld [smem:[#allocation7 + $0x29]]
        %v767 = vstv %s766
        %v768 = vmul.f32 %v690, %v767
        %v769 = vmul.f32 %v691, %v767
        %772 = vrot.lane.b32.xlu0 %v768, 122
        %v773 = vpop.permute.xlu0 %772
        %774 = vrot.lane.b32.xlu0 %v769, 122
        %v775 = vpop.permute.xlu0 %774
        %v778 = vadd.f32 %v764, %v773
        %v779 = vadd.f32 %v765, %v775
        %v780 = vld [vmem:[#allocation2 + $0x6] sm:$0xff]
        %v781 = vld [vmem:[#allocation2 + $0xe] sm:$0xff]
        %s782 = sld [smem:[#allocation7 + $0x2a]]
        %v783 = vstv %s782
        %v784 = vmul.f32 %v780, %v783
        %v785 = vmul.f32 %v781, %v783
        %s786 = sld [smem:[#allocation7 + $0x2b]]
        %v787 = vstv %s786
        %v788 = vmul.f32 %v780, %v787
        %v789 = vmul.f32 %v781, %v787
        %792 = vrot.lane.b32.xlu0 %v788, 127
        %v793 = vpop.permute.xlu0 %792
        %794 = vrot.lane.b32.xlu0 %v789, 127
        %v795 = vpop.permute.xlu0 %794
        %v798 = vadd.f32 %v784, %v793
        %v799 = vadd.f32 %v785, %v795
        %s800 = sld [smem:[#allocation7 + $0x2c]]
        %v801 = vstv %s800
        %v802 = vmul.f32 %v780, %v801
        %v803 = vmul.f32 %v781, %v801
        %806 = vrot.lane.b32.xlu0 %v802, 126
        %v807 = vpop.permute.xlu0 %806
        %808 = vrot.lane.b32.xlu0 %v803, 126
        %v809 = vpop.permute.xlu0 %808
        %v812 = vadd.f32 %v798, %v807
        %v813 = vadd.f32 %v799, %v809
        %s814 = sld [smem:[#allocation7 + $0x2d]]
        %v815 = vstv %s814
        %v816 = vmul.f32 %v780, %v815
        %v817 = vmul.f32 %v781, %v815
        %820 = vrot.lane.b32.xlu0 %v816, 125
        %v821 = vpop.permute.xlu0 %820
        %822 = vrot.lane.b32.xlu0 %v817, 125
        %v823 = vpop.permute.xlu0 %822
        %v826 = vadd.f32 %v812, %v821
        %v827 = vadd.f32 %v813, %v823
        %s828 = sld [smem:[#allocation7 + $0x2e]]
        %v829 = vstv %s828
        %v830 = vmul.f32 %v780, %v829
        %v831 = vmul.f32 %v781, %v829
        %834 = vrot.lane.b32.xlu0 %v830, 124
        %v835 = vpop.permute.xlu0 %834
        %836 = vrot.lane.b32.xlu0 %v831, 124
        %v837 = vpop.permute.xlu0 %836
        %v840 = vadd.f32 %v826, %v835
        %v841 = vadd.f32 %v827, %v837
        %s842 = sld [smem:[#allocation7 + $0x2f]]
        %v843 = vstv %s842
        %v844 = vmul.f32 %v780, %v843
        %v845 = vmul.f32 %v781, %v843
        %848 = vrot.lane.b32.xlu0 %v844, 123
        %v849 = vpop.permute.xlu0 %848
        %850 = vrot.lane.b32.xlu0 %v845, 123
        %v851 = vpop.permute.xlu0 %850
        %v854 = vadd.f32 %v840, %v849
        %v855 = vadd.f32 %v841, %v851
        %s856 = sld [smem:[#allocation7 + $0x30]]
        %v857 = vstv %s856
        %v858 = vmul.f32 %v780, %v857
        %v859 = vmul.f32 %v781, %v857
        %862 = vrot.lane.b32.xlu0 %v858, 122
        %v863 = vpop.permute.xlu0 %862
        %864 = vrot.lane.b32.xlu0 %v859, 122
        %v865 = vpop.permute.xlu0 %864
        %v868 = vadd.f32 %v854, %v863
        %v869 = vadd.f32 %v855, %v865
        %v870 = vld [vmem:[%s237] sm:$0xff]
        %v871 = vld [vmem:[%s237 + $0x8] sm:$0xff]
        %s872 = sld [smem:[#allocation7 + $0x31]]
        %v873 = vstv %s872
        %v874 = vmul.f32 %v870, %v873
        %v875 = vmul.f32 %v871, %v873
        %s876 = sld [smem:[#allocation7 + $0x32]]
        %v877 = vstv %s876
        %v878 = vmul.f32 %v870, %v877
        %v879 = vmul.f32 %v871, %v877
        %882 = vrot.lane.b32.xlu0 %v878, 127
        %v883 = vpop.permute.xlu0 %882
        %884 = vrot.lane.b32.xlu0 %v879, 127
        %v885 = vpop.permute.xlu0 %884
        %v888 = vadd.f32 %v874, %v883
        %v889 = vadd.f32 %v875, %v885
        %s890 = sld [smem:[#allocation7 + $0x33]]
        %v891 = vstv %s890
        %v892 = vmul.f32 %v870, %v891
        %v893 = vmul.f32 %v871, %v891
        %896 = vrot.lane.b32.xlu0 %v892, 126
        %v897 = vpop.permute.xlu0 %896
        %898 = vrot.lane.b32.xlu0 %v893, 126
        %v899 = vpop.permute.xlu0 %898
        %v902 = vadd.f32 %v888, %v897
        %v903 = vadd.f32 %v889, %v899
        %s904 = sld [smem:[#allocation7 + $0x34]]
        %v905 = vstv %s904
        %v906 = vmul.f32 %v870, %v905
        %v907 = vmul.f32 %v871, %v905
        %910 = vrot.lane.b32.xlu0 %v906, 125
        %v911 = vpop.permute.xlu0 %910
        %912 = vrot.lane.b32.xlu0 %v907, 125
        %v913 = vpop.permute.xlu0 %912
        %v916 = vadd.f32 %v902, %v911
        %v917 = vadd.f32 %v903, %v913
        %s918 = sld [smem:[#allocation7 + $0x35]]
        %v919 = vstv %s918
        %v920 = vmul.f32 %v870, %v919
        %v921 = vmul.f32 %v871, %v919
        %924 = vrot.lane.b32.xlu0 %v920, 124
        %v925 = vpop.permute.xlu0 %924
        %926 = vrot.lane.b32.xlu0 %v921, 124
        %v927 = vpop.permute.xlu0 %926
        %v930 = vadd.f32 %v916, %v925
        %v931 = vadd.f32 %v917, %v927
        %s932 = sld [smem:[#allocation7 + $0x36]]
        %v933 = vstv %s932
        %v934 = vmul.f32 %v870, %v933
        %v935 = vmul.f32 %v871, %v933
        %938 = vrot.lane.b32.xlu0 %v934, 123
        %v939 = vpop.permute.xlu0 %938
        %940 = vrot.lane.b32.xlu0 %v935, 123
        %v941 = vpop.permute.xlu0 %940
        %v944 = vadd.f32 %v930, %v939
        %v945 = vadd.f32 %v931, %v941
        %s946 = sld [smem:[#allocation7 + $0x37]]
        %v947 = vstv %s946
        %v948 = vmul.f32 %v870, %v947
        %v949 = vmul.f32 %v871, %v947
        %952 = vrot.lane.b32.xlu0 %v948, 122
        %v953 = vpop.permute.xlu0 %952
        %954 = vrot.lane.b32.xlu0 %v949, 122
        %v955 = vpop.permute.xlu0 %954
        %v958 = vadd.f32 %v944, %v953
        %v959 = vadd.f32 %v945, %v955
        %v960 = vld [vmem:[%s237 + $0x1] sm:$0xff]
        %v961 = vld [vmem:[%s237 + $0x9] sm:$0xff]
        %s962 = sld [smem:[#allocation7 + $0x38]]
        %v963 = vstv %s962
        %v964 = vmul.f32 %v960, %v963
        %v965 = vmul.f32 %v961, %v963
        %s966 = sld [smem:[#allocation7 + $0x39]]
        %v967 = vstv %s966
        %v968 = vmul.f32 %v960, %v967
        %v969 = vmul.f32 %v961, %v967
        %972 = vrot.lane.b32.xlu0 %v968, 127
        %v973 = vpop.permute.xlu0 %972
        %974 = vrot.lane.b32.xlu0 %v969, 127
        %v975 = vpop.permute.xlu0 %974
        %v978 = vadd.f32 %v964, %v973
        %v979 = vadd.f32 %v965, %v975
        %s980 = sld [smem:[#allocation7 + $0x3a]]
        %v981 = vstv %s980
        %v982 = vmul.f32 %v960, %v981
        %v983 = vmul.f32 %v961, %v981
        %986 = vrot.lane.b32.xlu0 %v982, 126
        %v987 = vpop.permute.xlu0 %986
        %988 = vrot.lane.b32.xlu0 %v983, 126
        %v989 = vpop.permute.xlu0 %988
        %v992 = vadd.f32 %v978, %v987
        %v993 = vadd.f32 %v979, %v989
        %s994 = sld [smem:[#allocation7 + $0x3b]]
        %v995 = vstv %s994
        %v996 = vmul.f32 %v960, %v995
        %v997 = vmul.f32 %v961, %v995
        %1000 = vrot.lane.b32.xlu0 %v996, 125
        %v1001 = vpop.permute.xlu0 %1000
        %1002 = vrot.lane.b32.xlu0 %v997, 125
        %v1003 = vpop.permute.xlu0 %1002
        %v1006 = vadd.f32 %v992, %v1001
        %v1007 = vadd.f32 %v993, %v1003
        %s1008 = sld [smem:[#allocation7 + $0x3c]]
        %v1009 = vstv %s1008
        %v1010 = vmul.f32 %v960, %v1009
        %v1011 = vmul.f32 %v961, %v1009
        %1014 = vrot.lane.b32.xlu0 %v1010, 124
        %v1015 = vpop.permute.xlu0 %1014
        %1016 = vrot.lane.b32.xlu0 %v1011, 124
        %v1017 = vpop.permute.xlu0 %1016
        %v1020 = vadd.f32 %v1006, %v1015
        %v1021 = vadd.f32 %v1007, %v1017
        %s1022 = sld [smem:[#allocation7 + $0x3d]]
        %v1023 = vstv %s1022
        %v1024 = vmul.f32 %v960, %v1023
        %v1025 = vmul.f32 %v961, %v1023
        %1028 = vrot.lane.b32.xlu0 %v1024, 123
        %v1029 = vpop.permute.xlu0 %1028
        %1030 = vrot.lane.b32.xlu0 %v1025, 123
        %v1031 = vpop.permute.xlu0 %1030
        %v1034 = vadd.f32 %v1020, %v1029
        %v1035 = vadd.f32 %v1021, %v1031
        %s1036 = sld [smem:[#allocation7 + $0x3e]]
        %v1037 = vstv %s1036
        %v1038 = vmul.f32 %v960, %v1037
        %v1039 = vmul.f32 %v961, %v1037
        %1042 = vrot.lane.b32.xlu0 %v1038, 122
        %v1043 = vpop.permute.xlu0 %1042
        %1044 = vrot.lane.b32.xlu0 %v1039, 122
        %v1045 = vpop.permute.xlu0 %1044
        %v1048 = vadd.f32 %v1034, %v1043
        %v1049 = vadd.f32 %v1035, %v1045
        %v1050 = vld [vmem:[%s237 + $0x2] sm:$0xff]
        %v1051 = vld [vmem:[%s237 + $0xa] sm:$0xff]
        %s1052 = sld [smem:[#allocation7 + $0x3f]]
        %v1053 = vstv %s1052
        %v1054 = vmul.f32 %v1050, %v1053
        %v1055 = vmul.f32 %v1051, %v1053
        %s1056 = sld [smem:[#allocation7 + $0x40]]
        %v1057 = vstv %s1056
        %v1058 = vmul.f32 %v1050, %v1057
        %v1059 = vmul.f32 %v1051, %v1057
        %1062 = vrot.lane.b32.xlu0 %v1058, 127
        %v1063 = vpop.permute.xlu0 %1062
        %1064 = vrot.lane.b32.xlu0 %v1059, 127
        %v1065 = vpop.permute.xlu0 %1064
        %v1068 = vadd.f32 %v1054, %v1063
        %v1069 = vadd.f32 %v1055, %v1065
        %s1070 = sld [smem:[#allocation7 + $0x41]]
        %v1071 = vstv %s1070
        %v1072 = vmul.f32 %v1050, %v1071
        %v1073 = vmul.f32 %v1051, %v1071
        %1076 = vrot.lane.b32.xlu0 %v1072, 126
        %v1077 = vpop.permute.xlu0 %1076
        %1078 = vrot.lane.b32.xlu0 %v1073, 126
        %v1079 = vpop.permute.xlu0 %1078
        %v1082 = vadd.f32 %v1068, %v1077
        %v1083 = vadd.f32 %v1069, %v1079
        %s1084 = sld [smem:[#allocation7 + $0x42]]
        %v1085 = vstv %s1084
        %v1086 = vmul.f32 %v1050, %v1085
        %v1087 = vmul.f32 %v1051, %v1085
        %1090 = vrot.lane.b32.xlu0 %v1086, 125
        %v1091 = vpop.permute.xlu0 %1090
        %1092 = vrot.lane.b32.xlu0 %v1087, 125
        %v1093 = vpop.permute.xlu0 %1092
        %v1096 = vadd.f32 %v1082, %v1091
        %v1097 = vadd.f32 %v1083, %v1093
        %s1098 = sld [smem:[#allocation7 + $0x43]]
        %v1099 = vstv %s1098
        %v1100 = vmul.f32 %v1050, %v1099
        %v1101 = vmul.f32 %v1051, %v1099
        %1104 = vrot.lane.b32.xlu0 %v1100, 124
        %v1105 = vpop.permute.xlu0 %1104
        %1106 = vrot.lane.b32.xlu0 %v1101, 124
        %v1107 = vpop.permute.xlu0 %1106
        %v1110 = vadd.f32 %v1096, %v1105
        %v1111 = vadd.f32 %v1097, %v1107
        %s1112 = sld [smem:[#allocation7 + $0x44]]
        %v1113 = vstv %s1112
        %v1114 = vmul.f32 %v1050, %v1113
        %v1115 = vmul.f32 %v1051, %v1113
        %1118 = vrot.lane.b32.xlu0 %v1114, 123
        %v1119 = vpop.permute.xlu0 %1118
        %1120 = vrot.lane.b32.xlu0 %v1115, 123
        %v1121 = vpop.permute.xlu0 %1120
        %v1124 = vadd.f32 %v1110, %v1119
        %v1125 = vadd.f32 %v1111, %v1121
        %s1126 = sld [smem:[#allocation7 + $0x45]]
        %v1127 = vstv %s1126
        %v1128 = vmul.f32 %v1050, %v1127
        %v1129 = vmul.f32 %v1051, %v1127
        %1132 = vrot.lane.b32.xlu0 %v1128, 122
        %v1133 = vpop.permute.xlu0 %1132
        %1134 = vrot.lane.b32.xlu0 %v1129, 122
        %v1135 = vpop.permute.xlu0 %1134
        %v1138 = vadd.f32 %v1124, %v1133
        %v1139 = vadd.f32 %v1125, %v1135
        %v1140 = vld [vmem:[%s237 + $0x3] sm:$0xff]
        %v1141 = vld [vmem:[%s237 + $0xb] sm:$0xff]
        %s1142 = sld [smem:[#allocation7 + $0x46]]
        %v1143 = vstv %s1142
        %v1144 = vmul.f32 %v1140, %v1143
        %v1145 = vmul.f32 %v1141, %v1143
        %s1146 = sld [smem:[#allocation7 + $0x47]]
        %v1147 = vstv %s1146
        %v1148 = vmul.f32 %v1140, %v1147
        %v1149 = vmul.f32 %v1141, %v1147
        %1152 = vrot.lane.b32.xlu0 %v1148, 127
        %v1153 = vpop.permute.xlu0 %1152
        %1154 = vrot.lane.b32.xlu0 %v1149, 127
        %v1155 = vpop.permute.xlu0 %1154
        %v1158 = vadd.f32 %v1144, %v1153
        %v1159 = vadd.f32 %v1145, %v1155
        %s1160 = sld [smem:[#allocation7 + $0x48]]
        %v1161 = vstv %s1160
        %v1162 = vmul.f32 %v1140, %v1161
        %v1163 = vmul.f32 %v1141, %v1161
        %1166 = vrot.lane.b32.xlu0 %v1162, 126
        %v1167 = vpop.permute.xlu0 %1166
        %1168 = vrot.lane.b32.xlu0 %v1163, 126
        %v1169 = vpop.permute.xlu0 %1168
        %v1172 = vadd.f32 %v1158, %v1167
        %v1173 = vadd.f32 %v1159, %v1169
        %s1174 = sld [smem:[#allocation7 + $0x49]]
        %v1175 = vstv %s1174
        %v1176 = vmul.f32 %v1140, %v1175
        %v1177 = vmul.f32 %v1141, %v1175
        %1180 = vrot.lane.b32.xlu0 %v1176, 125
        %v1181 = vpop.permute.xlu0 %1180
        %1182 = vrot.lane.b32.xlu0 %v1177, 125
        %v1183 = vpop.permute.xlu0 %1182
        %v1186 = vadd.f32 %v1172, %v1181
        %v1187 = vadd.f32 %v1173, %v1183
        %s1188 = sld [smem:[#allocation7 + $0x4a]]
        %v1189 = vstv %s1188
        %v1190 = vmul.f32 %v1140, %v1189
        %v1191 = vmul.f32 %v1141, %v1189
        %1194 = vrot.lane.b32.xlu0 %v1190, 124
        %v1195 = vpop.permute.xlu0 %1194
        %1196 = vrot.lane.b32.xlu0 %v1191, 124
        %v1197 = vpop.permute.xlu0 %1196
        %v1200 = vadd.f32 %v1186, %v1195
        %v1201 = vadd.f32 %v1187, %v1197
        %s1202 = sld [smem:[#allocation7 + $0x4b]]
        %v1203 = vstv %s1202
        %v1204 = vmul.f32 %v1140, %v1203
        %v1205 = vmul.f32 %v1141, %v1203
        %1208 = vrot.lane.b32.xlu0 %v1204, 123
        %v1209 = vpop.permute.xlu0 %1208
        %1210 = vrot.lane.b32.xlu0 %v1205, 123
        %v1211 = vpop.permute.xlu0 %1210
        %v1214 = vadd.f32 %v1200, %v1209
        %v1215 = vadd.f32 %v1201, %v1211
        %s1216 = sld [smem:[#allocation7 + $0x4c]]
        %v1217 = vstv %s1216
        %v1218 = vmul.f32 %v1140, %v1217
        %v1219 = vmul.f32 %v1141, %v1217
        %1222 = vrot.lane.b32.xlu0 %v1218, 122
        %v1223 = vpop.permute.xlu0 %1222
        %1224 = vrot.lane.b32.xlu0 %v1219, 122
        %v1225 = vpop.permute.xlu0 %1224
        %v1228 = vadd.f32 %v1214, %v1223
        %v1229 = vadd.f32 %v1215, %v1225
        %v1230 = vld [vmem:[%s237 + $0x4] sm:$0xff]
        %v1231 = vld [vmem:[%s237 + $0xc] sm:$0xff]
        %s1232 = sld [smem:[#allocation7 + $0x4d]]
        %v1233 = vstv %s1232
        %v1234 = vmul.f32 %v1230, %v1233
        %v1235 = vmul.f32 %v1231, %v1233
        %s1236 = sld [smem:[#allocation7 + $0x4e]]
        %v1237 = vstv %s1236
        %v1238 = vmul.f32 %v1230, %v1237
        %v1239 = vmul.f32 %v1231, %v1237
        %1242 = vrot.lane.b32.xlu0 %v1238, 127
        %v1243 = vpop.permute.xlu0 %1242
        %1244 = vrot.lane.b32.xlu0 %v1239, 127
        %v1245 = vpop.permute.xlu0 %1244
        %v1248 = vadd.f32 %v1234, %v1243
        %v1249 = vadd.f32 %v1235, %v1245
        %s1250 = sld [smem:[#allocation7 + $0x4f]]
        %v1251 = vstv %s1250
        %v1252 = vmul.f32 %v1230, %v1251
        %v1253 = vmul.f32 %v1231, %v1251
        %1256 = vrot.lane.b32.xlu0 %v1252, 126
        %v1257 = vpop.permute.xlu0 %1256
        %1258 = vrot.lane.b32.xlu0 %v1253, 126
        %v1259 = vpop.permute.xlu0 %1258
        %v1262 = vadd.f32 %v1248, %v1257
        %v1263 = vadd.f32 %v1249, %v1259
        %s1264 = sld [smem:[#allocation7 + $0x50]]
        %v1265 = vstv %s1264
        %v1266 = vmul.f32 %v1230, %v1265
        %v1267 = vmul.f32 %v1231, %v1265
        %1270 = vrot.lane.b32.xlu0 %v1266, 125
        %v1271 = vpop.permute.xlu0 %1270
        %1272 = vrot.lane.b32.xlu0 %v1267, 125
        %v1273 = vpop.permute.xlu0 %1272
        %v1276 = vadd.f32 %v1262, %v1271
        %v1277 = vadd.f32 %v1263, %v1273
        %s1278 = sld [smem:[#allocation7 + $0x51]]
        %v1279 = vstv %s1278
        %v1280 = vmul.f32 %v1230, %v1279
        %v1281 = vmul.f32 %v1231, %v1279
        %1284 = vrot.lane.b32.xlu0 %v1280, 124
        %v1285 = vpop.permute.xlu0 %1284
        %1286 = vrot.lane.b32.xlu0 %v1281, 124
        %v1287 = vpop.permute.xlu0 %1286
        %v1290 = vadd.f32 %v1276, %v1285
        %v1291 = vadd.f32 %v1277, %v1287
        %s1292 = sld [smem:[#allocation7 + $0x52]]
        %v1293 = vstv %s1292
        %v1294 = vmul.f32 %v1230, %v1293
        %v1295 = vmul.f32 %v1231, %v1293
        %1298 = vrot.lane.b32.xlu0 %v1294, 123
        %v1299 = vpop.permute.xlu0 %1298
        %1300 = vrot.lane.b32.xlu0 %v1295, 123
        %v1301 = vpop.permute.xlu0 %1300
        %v1304 = vadd.f32 %v1290, %v1299
        %v1305 = vadd.f32 %v1291, %v1301
        %s1306 = sld [smem:[#allocation7 + $0x53]]
        %v1307 = vstv %s1306
        %v1308 = vmul.f32 %v1230, %v1307
        %v1309 = vmul.f32 %v1231, %v1307
        %1312 = vrot.lane.b32.xlu0 %v1308, 122
        %v1313 = vpop.permute.xlu0 %1312
        %1314 = vrot.lane.b32.xlu0 %v1309, 122
        %v1315 = vpop.permute.xlu0 %1314
        %v1318 = vadd.f32 %v1304, %v1313
        %v1319 = vadd.f32 %v1305, %v1315
        %v1320 = vld [vmem:[%s237 + $0x5] sm:$0xff]
        %v1321 = vld [vmem:[%s237 + $0xd] sm:$0xff]
        %s1322 = sld [smem:[#allocation7 + $0x54]]
        %v1323 = vstv %s1322
        %v1324 = vmul.f32 %v1320, %v1323
        %v1325 = vmul.f32 %v1321, %v1323
        %s1326 = sld [smem:[#allocation7 + $0x55]]
        %v1327 = vstv %s1326
        %v1328 = vmul.f32 %v1320, %v1327
        %v1329 = vmul.f32 %v1321, %v1327
        %1332 = vrot.lane.b32.xlu0 %v1328, 127
        %v1333 = vpop.permute.xlu0 %1332
        %1334 = vrot.lane.b32.xlu0 %v1329, 127
        %v1335 = vpop.permute.xlu0 %1334
        %v1338 = vadd.f32 %v1324, %v1333
        %v1339 = vadd.f32 %v1325, %v1335
        %s1340 = sld [smem:[#allocation7 + $0x56]]
        %v1341 = vstv %s1340
        %v1342 = vmul.f32 %v1320, %v1341
        %v1343 = vmul.f32 %v1321, %v1341
        %1346 = vrot.lane.b32.xlu0 %v1342, 126
        %v1347 = vpop.permute.xlu0 %1346
        %1348 = vrot.lane.b32.xlu0 %v1343, 126
        %v1349 = vpop.permute.xlu0 %1348
        %v1352 = vadd.f32 %v1338, %v1347
        %v1353 = vadd.f32 %v1339, %v1349
        %s1354 = sld [smem:[#allocation7 + $0x57]]
        %v1355 = vstv %s1354
        %v1356 = vmul.f32 %v1320, %v1355
        %v1357 = vmul.f32 %v1321, %v1355
        %1360 = vrot.lane.b32.xlu0 %v1356, 125
        %v1361 = vpop.permute.xlu0 %1360
        %1362 = vrot.lane.b32.xlu0 %v1357, 125
        %v1363 = vpop.permute.xlu0 %1362
        %v1366 = vadd.f32 %v1352, %v1361
        %v1367 = vadd.f32 %v1353, %v1363
        %s1368 = sld [smem:[#allocation7 + $0x58]]
        %v1369 = vstv %s1368
        %v1370 = vmul.f32 %v1320, %v1369
        %v1371 = vmul.f32 %v1321, %v1369
        %1374 = vrot.lane.b32.xlu0 %v1370, 124
        %v1375 = vpop.permute.xlu0 %1374
        %1376 = vrot.lane.b32.xlu0 %v1371, 124
        %v1377 = vpop.permute.xlu0 %1376
        %v1380 = vadd.f32 %v1366, %v1375
        %v1381 = vadd.f32 %v1367, %v1377
        %s1382 = sld [smem:[#allocation7 + $0x59]]
        %v1383 = vstv %s1382
        %v1384 = vmul.f32 %v1320, %v1383
        %v1385 = vmul.f32 %v1321, %v1383
        %1388 = vrot.lane.b32.xlu0 %v1384, 123
        %v1389 = vpop.permute.xlu0 %1388
        %1390 = vrot.lane.b32.xlu0 %v1385, 123
        %v1391 = vpop.permute.xlu0 %1390
        %v1394 = vadd.f32 %v1380, %v1389
        %v1395 = vadd.f32 %v1381, %v1391
        %s1396 = sld [smem:[#allocation7 + $0x5a]]
        %v1397 = vstv %s1396
        %v1398 = vmul.f32 %v1320, %v1397
        %v1399 = vmul.f32 %v1321, %v1397
        %1402 = vrot.lane.b32.xlu0 %v1398, 122
        %v1403 = vpop.permute.xlu0 %1402
        %1404 = vrot.lane.b32.xlu0 %v1399, 122
        %v1405 = vpop.permute.xlu0 %1404
        %v1408 = vadd.f32 %v1394, %v1403
        %v1409 = vadd.f32 %v1395, %v1405
        %v1410 = vld [vmem:[%s237 + $0x6] sm:$0xff]
        %v1411 = vld [vmem:[%s237 + $0xe] sm:$0xff]
        %s1412 = sld [smem:[#allocation7 + $0x5b]]
        %v1413 = vstv %s1412
        %v1414 = vmul.f32 %v1410, %v1413
        %v1415 = vmul.f32 %v1411, %v1413
        %s1416 = sld [smem:[#allocation7 + $0x5c]]
        %v1417 = vstv %s1416
        %v1418 = vmul.f32 %v1410, %v1417
        %v1419 = vmul.f32 %v1411, %v1417
        %1422 = vrot.lane.b32.xlu0 %v1418, 127
        %v1423 = vpop.permute.xlu0 %1422
        %1424 = vrot.lane.b32.xlu0 %v1419, 127
        %v1425 = vpop.permute.xlu0 %1424
        %v1428 = vadd.f32 %v1414, %v1423
        %v1429 = vadd.f32 %v1415, %v1425
        %s1430 = sld [smem:[#allocation7 + $0x5d]]
        %v1431 = vstv %s1430
        %v1432 = vmul.f32 %v1410, %v1431
        %v1433 = vmul.f32 %v1411, %v1431
        %1436 = vrot.lane.b32.xlu0 %v1432, 126
        %v1437 = vpop.permute.xlu0 %1436
        %1438 = vrot.lane.b32.xlu0 %v1433, 126
        %v1439 = vpop.permute.xlu0 %1438
        %v1442 = vadd.f32 %v1428, %v1437
        %v1443 = vadd.f32 %v1429, %v1439
        %s1444 = sld [smem:[#allocation7 + $0x5e]]
        %v1445 = vstv %s1444
        %v1446 = vmul.f32 %v1410, %v1445
        %v1447 = vmul.f32 %v1411, %v1445
        %1450 = vrot.lane.b32.xlu0 %v1446, 125
        %v1451 = vpop.permute.xlu0 %1450
        %1452 = vrot.lane.b32.xlu0 %v1447, 125
        %v1453 = vpop.permute.xlu0 %1452
        %v1456 = vadd.f32 %v1442, %v1451
        %v1457 = vadd.f32 %v1443, %v1453
        %s1458 = sld [smem:[#allocation7 + $0x5f]]
        %v1459 = vstv %s1458
        %v1460 = vmul.f32 %v1410, %v1459
        %v1461 = vmul.f32 %v1411, %v1459
        %1464 = vrot.lane.b32.xlu0 %v1460, 124
        %v1465 = vpop.permute.xlu0 %1464
        %1466 = vrot.lane.b32.xlu0 %v1461, 124
        %v1467 = vpop.permute.xlu0 %1466
        %v1470 = vadd.f32 %v1456, %v1465
        %v1471 = vadd.f32 %v1457, %v1467
        %s1472 = sld [smem:[#allocation7 + $0x60]]
        %v1473 = vstv %s1472
        %v1474 = vmul.f32 %v1410, %v1473
        %v1475 = vmul.f32 %v1411, %v1473
        %1478 = vrot.lane.b32.xlu0 %v1474, 123
        %v1479 = vpop.permute.xlu0 %1478
        %1480 = vrot.lane.b32.xlu0 %v1475, 123
        %v1481 = vpop.permute.xlu0 %1480
        %v1484 = vadd.f32 %v1470, %v1479
        %v1485 = vadd.f32 %v1471, %v1481
        %s1486 = sld [smem:[#allocation7 + $0x61]]
        %v1487 = vstv %s1486
        %v1488 = vmul.f32 %v1410, %v1487
        %v1489 = vmul.f32 %v1411, %v1487
        %1492 = vrot.lane.b32.xlu0 %v1488, 122
        %v1493 = vpop.permute.xlu0 %1492
        %1494 = vrot.lane.b32.xlu0 %v1489, 122
        %v1495 = vpop.permute.xlu0 %1494
        %v1498 = vadd.f32 %v1484, %v1493
        %v1499 = vadd.f32 %v1485, %v1495
        %v1500 = vadd.f32 %v328, %v418
        %v1501 = vadd.f32 %v329, %v419
        %v1502 = vadd.f32 %v508, %v598
        %v1503 = vadd.f32 %v509, %v599
        %v1504 = vadd.f32 %v688, %v778
        %v1505 = vadd.f32 %v689, %v779
        %v1506 = vadd.f32 %v868, %v958
        %v1507 = vadd.f32 %v869, %v959
        %v1508 = vadd.f32 %v1048, %v1138
        %v1509 = vadd.f32 %v1049, %v1139
        %v1510 = vadd.f32 %v1228, %v1318
        %v1511 = vadd.f32 %v1229, %v1319
        %v1512 = vadd.f32 %v1408, %v1498
        %v1513 = vadd.f32 %v1409, %v1499
        %v1514 = vadd.f32 %v1500, %v1502
        %v1515 = vadd.f32 %v1501, %v1503
        %v1516 = vadd.f32 %v1504, %v1506
        %v1517 = vadd.f32 %v1505, %v1507
        %v1518 = vadd.f32 %v1508, %v1510
        %v1519 = vadd.f32 %v1509, %v1511
        %v1520 = vadd.f32 %v1514, %v1516
        %v1521 = vadd.f32 %v1515, %v1517
        %v1522 = vadd.f32 %v1518, %v1512
        %v1523 = vadd.f32 %v1519, %v1513
        %v1524 = vadd.f32 %v1520, %v1522
        %v1525 = vadd.f32 %v1521, %v1523
        %v1526 = vxor.u32 %v1524, 2147483648
        %v1527 = vxor.u32 %v1525, 2147483648
        %v1528 = vmul.f32 %v1526, 1.442695
        %v1529 = vpow.pop %v1528
        %v1530 = vmul.f32 %v1527, 1.442695
        %v1531 = vpow.pop %v1530
        %v1532 = vadd.f32 %v1529, 1.0
        %v1533 = vadd.f32 %v1531, 1.0
        %v1534 = vrcp.pop %v1532
        %v1535 = vmul.f32 1.0, %v1534
        %v1536 = vrcp.pop %v1533
        %v1537 = vmul.f32 1.0, %v1536
        %vm1538 = vcmask 130048
        %1539 = vst.msk [vmem:[%s175] sm:$0xff] %vm1538, %v1535
        %1540 = vst.msk [vmem:[%s175 + $0x8] sm:$0xff] %vm1538, %v1537
        %s1541 = sand.u32 %s75, 1
        %s1542 = scalar_lea.sflag [#allocation5], %s1541
        %s1543 = sand.u32 %s75, 1
        %s1544 = smul.addr %s1543, 16
        %s1545 = scalar_lea.vmem [#allocation8], %s1544
        // Predicated region
        $region37: #{tpu_custom_call.1} parent=27 // pred_check
          %p1546 = pneg %p85
        $region38: #{tpu_custom_call.1} parent=27 // pred_check_branch
          %1548 = sbr.rel (%p1546) target = $region40
        $region39: #{tpu_custom_call.1} parent=27 // pred_region
          %s1550 = ssub.s32 256, 256
          %1551 = vsyncadd %s1542, %s1550
          %s1552 = smul.addr %s20, 2
          %s1553 = smul.addr %s1552, 128
          %s1554 = scalar_lea.hbm %s2, %s1553
          %s1555 = sshll.u32 %s1545, 4
          %s1556 = int_to_ptr.vmem [resolvable:$true] %s1555
          %1561 = dma.vmem_to_hbm [thread:$0]  %s1556, 256, %s1554, %s1542, 128, 128, 8
        $region40: #{tpu_custom_call.1} parent=27 // pred_fallthru
          _
      $region28: #{tpu_custom_call.1} parent=5 // pred_fallthru
        _
      %p1562 = scmp.le.s32.totalorder 2, %s15
      // Predicated region
      $region41: #{tpu_custom_call.1} parent=5 // pred_check
        %p1563 = pneg %p1562
      $region42: #{tpu_custom_call.1} parent=5 // pred_check_branch
        %1565 = sbr.rel (%p1563) target = $region44
      $region43: #{tpu_custom_call.1} parent=5 // pred_region
        %s1566 = ssub.s32 %s15, 2
        // Predicated region
        $region45: #{tpu_custom_call.1} parent=43 // pred_check
          %p1567 = pneg %p91
        $region46: #{tpu_custom_call.1} parent=43 // pred_check_branch
          %1569 = sbr.rel (%p1567) target = $region48
        $region47: #{tpu_custom_call.1} parent=43 // pred_region
          %s1570 = sand.u32 %s76, 1
          %s1571 = scalar_lea.sflag [#allocation5], %s1570
          %s1572 = sand.u32 %s76, 1
          %s1573 = smul.addr %s1572, 16
          %s1574 = scalar_lea.vmem [#allocation8], %s1573
          %1575 = dma.done %s1571, 256
        $region48: #{tpu_custom_call.1} parent=43 // pred_fallthru
          _
      $region44: #{tpu_custom_call.1} parent=5 // pred_fallthru
        _
    $region6: #{tpu_custom_call.1} parent=1 // loop_footer
      %s19 = sadd.s32 1, %s15
    $region7: #{tpu_custom_call.1} parent=1 // loop_footer_branch
      %14 = sbr.rel target = $region3
    $region8: #{tpu_custom_call.1} parent=1 // loop_exit
      _
    %1576 = vsyncpa [#allocation4], 1
    %s1577 = scalar_lea.sflag [#allocation4], 1
    %1578 = vsyncpa %s1577, 1
    %1579 = vsyncpa [#allocation5], 1
    %s1580 = scalar_lea.sflag [#allocation5], 1
    %1581 = vsyncpa %s1580, 1
    %1582 = vsyncpa [#allocation6], 1
    %s1583 = scalar_lea.sflag [#allocation6], 1
    %1584 = vsyncpa %s1583, 1

</llo_original>
